<compile_context>
chip_gen: v5e
topology: v5e:2x2
jax: 0.10.0
libtpu: 0.0.40
codegen_flags: <defaults>
</compile_context>

<pallas_src>
from functools import partial

import numpy as np

import jax
import jax.numpy as jnp
from jax import lax
from jax.experimental import pallas as pl
from jax.experimental.pallas import tpu as pltpu


# ------------------------------ fixed LeNet dims ---------------------------
IMG = 28          # input spatial size
K = 5             # conv kernel size
C1 = 6            # conv1 out channels
H1 = IMG - K + 1  # 24, conv1 spatial
P1 = H1 // 2      # 12, after pool1
C2 = 16           # conv2 out channels
H2 = P1 - K + 1   # 8, conv2 spatial
P2 = H2 // 2      # 4, after pool2
FC1_IN = C2 * P2 * P2   # 256
FC1_OUT, FC2_OUT = 120, 84


# ------------------------------- Pallas kernel ------------------------------

def _lenet_kernel(x_ref, t1_ref, b1_ref, dh1_ref, dw1_ref,
                  t2_ref, b2_ref, dh2_ref, dw2_ref,
                  w1_ref, fb1_ref, w2_ref, fb2_ref, w3_ref, fb3_ref,
                  o_ref, p2s_ref):
    """LeNet forward for a block of `ims` images (one grid step), all in VMEM."""
    f32 = jnp.float32
    ims = x_ref.shape[0]

    # ---------------- per-image conv / pool stage (static unroll) -----------
    for b in range(ims):
        xn = x_ref[b, 0]                                         # (28, 28)

        # conv1 (5x5 valid) + bias + ReLU, channel-stacked (24, 6*24)
        acc1 = jnp.dot(xn[0:H1, :], t1_ref[0], preferred_element_type=f32)
        for i in range(1, K):
            acc1 = acc1 + jnp.dot(xn[i:i + H1, :], t1_ref[i],
                                  preferred_element_type=f32)
        y1 = jnp.maximum(acc1 + b1_ref[...], 0.0)                # (24, 144)

        # maxpool 2x2 / stride 2 -> (12, 6*12): max over 4 shifted corners,
        # then stride-2 row/column selection via two small GEMMs.
        m1 = jnp.maximum(
            jnp.maximum(y1[0:H1 - 1, 0:C1 * H1 - 1], y1[0:H1 - 1, 1:C1 * H1]),
            jnp.maximum(y1[1:H1, 0:C1 * H1 - 1], y1[1:H1, 1:C1 * H1]))
        p1 = jnp.dot(dh1_ref[...],
                     jnp.dot(m1, dw1_ref[...], preferred_element_type=f32),
                     preferred_element_type=f32)                 # (12, 72)

        # conv2 + bias + ReLU, stacked (8, 16*8)
        acc2 = jnp.dot(p1[0:H2, :], t2_ref[0], preferred_element_type=f32)
        for i in range(1, K):
            acc2 = acc2 + jnp.dot(p1[i:i + H2, :], t2_ref[i],
                                  preferred_element_type=f32)
        y2 = jnp.maximum(acc2 + b2_ref[...], 0.0)                # (8, 128)

        # maxpool -> (4, 16*4)
        m2 = jnp.maximum(
            jnp.maximum(y2[0:H2 - 1, 0:C2 * H2 - 1], y2[0:H2 - 1, 1:C2 * H2]),
            jnp.maximum(y2[1:H2, 0:C2 * H2 - 1], y2[1:H2, 1:C2 * H2]))
        p2 = jnp.dot(dh2_ref[...],
                     jnp.dot(m2, dw2_ref[...], preferred_element_type=f32),
                     preferred_element_type=f32)                 # (4, 64)

        # Scatter pooled rows into the batched scratch: row index = h*ims + b,
        # so that row-slab h of ALL images is a contiguous (ims, 64) block.
        for h in range(P2):
            r = h * ims + b
            p2s_ref[r:r + 1, :] = p2[h:h + 1, :]

    # ---------------- batched FC stage over all ims images ------------------
    # fc1: contract the 4 pooled row-slabs (fc1 weights pre-permuted to match).
    z1 = jnp.dot(p2s_ref[0:ims, :], w1_ref[0], preferred_element_type=f32)
    for h in range(1, P2):
        z1 = z1 + jnp.dot(p2s_ref[h * ims:(h + 1) * ims, :], w1_ref[h],
                          preferred_element_type=f32)
    h1 = jnp.maximum(z1 + fb1_ref[...], 0.0)                     # (ims, 120)

    # fc2 + ReLU, fc3 (class dim zero-padded to a lane-dense width)
    h2 = jnp.maximum(
        jnp.dot(h1, w2_ref[...], preferred_element_type=f32) + fb2_ref[...],
        0.0)                                                     # (ims, 84)
    out = jnp.dot(h2, w3_ref[...], preferred_element_type=f32) + fb3_ref[...]
    o_ref[...] = out.astype(o_ref.dtype)                         # (ims, 128)


# --------------------- one-time parameter preprocessing ---------------------

def _conv_band_matrices(w, in_width, out_width):
    """w: (OC, IC, KH, KW) -> T: (KH, IC*in_width, OC*out_width) such that
    sum_i act[i:i+OH, :] @ T[i] computes the valid conv, where act is the
    channel-stacked (H, IC*in_width) input slab."""
    OC, IC, KH, KW = w.shape
    T = np.zeros((KH, IC * in_width, OC * out_width), np.float32)
    for i in range(KH):
        for oc in range(OC):
            for c in range(IC):
                for j in range(KW):
                    for x in range(out_width):
                        T[i, c * in_width + x + j, oc * out_width + x] = w[oc, c, i, j]
    return T


def _pool_select_matrices(channels, in_hw, out_hw):
    """Stride-2 selection matrices for 2x2 max-pool on the channel-stacked
    layout: Dh (out_hw, in_hw-1) selects even rows, Dw (channels*in_hw-1,
    channels*out_hw) selects even columns within each channel block."""
    dh = np.zeros((out_hw, in_hw - 1), np.float32)
    for p in range(out_hw):
        dh[p, 2 * p] = 1.0
    dw = np.zeros((channels * in_hw - 1, channels * out_hw), np.float32)
    for c in range(channels):
        for q in range(out_hw):
            dw[c * in_hw + 2 * q, c * out_hw + q] = 1.0
    return dh, dw


def prepare_params(params):
    """Convert PyTorch-layout LeNet params into kernel operands (done once)."""
    w1 = np.asarray(params["conv1_w"], np.float32)   # (6, 1, 5, 5)
    b1 = np.asarray(params["conv1_b"], np.float32)
    w2 = np.asarray(params["conv2_w"], np.float32)   # (16, 6, 5, 5)
    b2 = np.asarray(params["conv2_b"], np.float32)
    fc1_w = np.asarray(params["fc1_w"], np.float32)  # (120, 256)
    fc1_b = np.asarray(params["fc1_b"], np.float32)
    fc2_w = np.asarray(params["fc2_w"], np.float32)  # (84, 120)
    fc2_b = np.asarray(params["fc2_b"], np.float32)
    fc3_w = np.asarray(params["fc3_w"], np.float32)  # (classes, 84)
    fc3_b = np.asarray(params["fc3_b"], np.float32)

    dh1, dw1 = _pool_select_matrices(C1, H1, P1)     # (12,23), (143,72)
    dh2, dw2 = _pool_select_matrices(C2, H2, P2)     # (4,7),  (127,64)

    # fc1 weight, permuted so the kernel contracts row-h slabs of the stacked
    # pooled activation (columns ordered c*P2 + w) against w1k[h].
    w1k = fc1_w.reshape(FC1_OUT, C2, P2, P2).transpose(2, 1, 3, 0)  # [h,c,w,k]
    w1k = w1k.reshape(P2, C2 * P2, FC1_OUT)                          # (4,64,120)

    # fc3 weight/bias padded to a lane-dense (multiple-of-128) class dim so
    # the kernel output store is an unmasked vst; wrapper slices it back.
    nc = fc3_w.shape[0]
    padc = ((nc + 127) // 128) * 128
    w3p = np.zeros((FC2_OUT, padc), np.float32)
    w3p[:, :nc] = fc3_w.T
    fb3 = np.zeros((1, padc), np.float32)
    fb3[0, :nc] = fc3_b

    prepped = {
        "t1": _conv_band_matrices(w1, IMG, H1),       # (5, 28, 144)
        "b1row": np.repeat(b1, H1)[None, :],          # (1, 144)
        "dh1": dh1, "dw1": dw1,
        "t2": _conv_band_matrices(w2, P1, H2),        # (5, 72, 128)
        "b2row": np.repeat(b2, H2)[None, :],          # (1, 128)
        "dh2": dh2, "dw2": dw2,
        "w1k": w1k, "fb1": fc1_b[None, :],
        "w2p": fc2_w.T, "fb2": fc2_b[None, :],        # (120, 84)
        "w3p": w3p, "fb3": fb3,                       # (84, padc)
    }
    return {k: jnp.asarray(v) for k, v in prepped.items()}


# --------------------------------- forward ----------------------------------

@partial(jax.jit, static_argnames=("num_classes", "block"))
def lenet_forward(prepped, x, num_classes=10, block=8):
    """x: (N, 1, 28, 28) float32 -> logits (N, num_classes)."""
    N = x.shape[0]
    assert x.shape[1:] == (1, IMG, IMG), x.shape
    padc = prepped["w3p"].shape[1]                   # lane-padded class dim
    assert padc >= num_classes

    ims = max(1, min(block, N))                      # images per grid step
    n_pad = pl.cdiv(N, ims) * ims

    xk = x.astype(jnp.float32)
    if n_pad != N:
        xk = jnp.pad(xk, ((0, n_pad - N), (0, 0), (0, 0), (0, 0)))

    def full(shape):
        nd = len(shape)
        return pl.BlockSpec(shape, lambda s, _nd=nd: (0,) * _nd)

    out = pl.pallas_call(
        _lenet_kernel,
        out_shape=jax.ShapeDtypeStruct((n_pad, padc), jnp.float32),
        grid=(n_pad // ims,),
        in_specs=[
            pl.BlockSpec((ims, 1, IMG, IMG), lambda s: (s, 0, 0, 0)),
            full((K, IMG, C1 * H1)), full((1, C1 * H1)),
            full((P1, H1 - 1)), full((C1 * H1 - 1, C1 * P1)),
            full((K, C1 * P1, C2 * H2)), full((1, C2 * H2)),
            full((P2, H2 - 1)), full((C2 * H2 - 1, C2 * P2)),
            full((P2, C2 * P2, FC1_OUT)), full((1, FC1_OUT)),
            full((FC1_OUT, FC2_OUT)), full((1, FC2_OUT)),
            full((FC2_OUT, padc)), full((1, padc)),
        ],
        out_specs=pl.BlockSpec((ims, padc), lambda s: (s, 0)),
        scratch_shapes=[pltpu.VMEM((P2 * ims, C2 * P2), jnp.float32)],
        compiler_params=pltpu.CompilerParams(
            dimension_semantics=("parallel",)),
    )(xk,
      prepped["t1"], prepped["b1row"], prepped["dh1"], prepped["dw1"],
      prepped["t2"], prepped["b2row"], prepped["dh2"], prepped["dw2"],
      prepped["w1k"], prepped["fb1"], prepped["w2p"], prepped["fb2"],
      prepped["w3p"], prepped["fb3"])
    return out[:N, :num_classes]


# ------------------------- params / reference / main ------------------------

def init_lenet_params(key, num_classes=10):
    """Deterministic synthetic parameters (PyTorch-default-style uniform init)."""
    def uniform(k, shape, fan_in):
        bound = 1.0 / np.sqrt(float(fan_in))
        return jax.random.uniform(k, shape, jnp.float32, -bound, bound)

    ks = jax.random.split(key, 10)
    return {
        "conv1_w": uniform(ks[0], (C1, 1, K, K), 1 * K * K),
        "conv1_b": uniform(ks[1], (C1,), 1 * K * K),
        "conv2_w": uniform(ks[2], (C2, C1, K, K), C1 * K * K),
        "conv2_b": uniform(ks[3], (C2,), C1 * K * K),
        "fc1_w": uniform(ks[4], (FC1_OUT, FC1_IN), FC1_IN),
        "fc1_b": uniform(ks[5], (FC1_OUT,), FC1_IN),
        "fc2_w": uniform(ks[6], (FC2_OUT, FC1_OUT), FC1_OUT),
        "fc2_b": uniform(ks[7], (FC2_OUT,), FC1_OUT),
        "fc3_w": uniform(ks[8], (num_classes, FC2_OUT), FC2_OUT),
        "fc3_b": uniform(ks[9], (num_classes,), FC2_OUT),
    }


def lenet_reference(params, x):
    """Pure-JAX reference matching the PyTorch module (for correctness check)."""
    dn = ("NCHW", "OIHW", "NCHW")
    y = lax.conv_general_dilated(x, params["conv1_w"], (1, 1), "VALID",
                                 dimension_numbers=dn)
    y = jax.nn.relu(y + params["conv1_b"][None, :, None, None])
    y = lax.reduce_window(y, -jnp.inf, lax.max, (1, 1, 2, 2), (1, 1, 2, 2), "VALID")
    y = lax.conv_general_dilated(y, params["conv2_w"], (1, 1), "VALID",
                                 dimension_numbers=dn)
    y = jax.nn.relu(y + params["conv2_b"][None, :, None, None])
    y = lax.reduce_window(y, -jnp.inf, lax.max, (1, 1, 2, 2), (1, 1, 2, 2), "VALID")
    y = y.reshape(y.shape[0], -1)
    y = jax.nn.relu(y @ params["fc1_w"].T + params["fc1_b"])
    y = jax.nn.relu(y @ params["fc2_w"].T + params["fc2_b"])
    return y @ params["fc3_w"].T + params["fc3_b"]


if __name__ == "__main__":
    key = jax.random.PRNGKey(0)
    pkey, xkey = jax.random.split(key)
    params = init_lenet_params(pkey, num_classes=10)
    prepped = prepare_params(params)   # one-time weight preprocessing

    # Batch of 2 MNIST-sized images (28x28 is required by the 16*4*4 flatten).
    x = jax.random.normal(xkey, (2, 1, IMG, IMG), dtype=jnp.float32)

    out = lenet_forward(prepped, x, num_classes=10)
    out = jax.block_until_ready(out)
    assert out.shape == (2, 10), out.shape
    assert out.dtype == jnp.float32

    ref = lenet_reference(params, x)
    assert jnp.allclose(out, ref, atol=2e-2, rtol=2e-2), \
        float(jnp.max(jnp.abs(out - ref)))
    print("KERNEL_OK")
</pallas_src>

<mosaic_0001>
module attributes {stable_mosaic.version = 11 : i64} {
  func.func @_lenet_kernel(%arg0: i32, %arg1: memref<2x1x28x28xf32, #tpu.memory_space<vmem>>, %arg2: memref<5x28x144xf32, #tpu.memory_space<vmem>>, %arg3: memref<1x144xf32, #tpu.memory_space<vmem>>, %arg4: memref<12x23xf32, #tpu.memory_space<vmem>>, %arg5: memref<143x72xf32, #tpu.memory_space<vmem>>, %arg6: memref<5x72x128xf32, #tpu.memory_space<vmem>>, %arg7: memref<1x128xf32, #tpu.memory_space<vmem>>, %arg8: memref<4x7xf32, #tpu.memory_space<vmem>>, %arg9: memref<127x64xf32, #tpu.memory_space<vmem>>, %arg10: memref<4x64x120xf32, #tpu.memory_space<vmem>>, %arg11: memref<1x120xf32, #tpu.memory_space<vmem>>, %arg12: memref<120x84xf32, #tpu.memory_space<vmem>>, %arg13: memref<1x84xf32, #tpu.memory_space<vmem>>, %arg14: memref<84x128xf32, #tpu.memory_space<vmem>>, %arg15: memref<1x128xf32, #tpu.memory_space<vmem>>, %arg16: memref<2x128xf32, #tpu.memory_space<vmem>>, %arg17: memref<8x64xf32, #tpu.memory_space<vmem>>) attributes {dimension_semantics = [#tpu.dimension_semantics<parallel>], iteration_bounds = array<i64: 1>, scalar_prefetch = 0 : i64, scratch_operands = 1 : i64, tpu.core_type = #tpu.core_type<tc>, window_params = [{transform_indices = @transform_0, window_bounds = array<i64: 2, 1, 28, 28>}, {pipeline_mode = #tpu.pipeline_mode<synchronous>, transform_indices = @transform_1, window_bounds = array<i64: 5, 28, 144>}, {pipeline_mode = #tpu.pipeline_mode<synchronous>, transform_indices = @transform_2, window_bounds = array<i64: 1, 144>}, {pipeline_mode = #tpu.pipeline_mode<synchronous>, transform_indices = @transform_3, window_bounds = array<i64: 12, 23>}, {pipeline_mode = #tpu.pipeline_mode<synchronous>, transform_indices = @transform_4, window_bounds = array<i64: 143, 72>}, {pipeline_mode = #tpu.pipeline_mode<synchronous>, transform_indices = @transform_5, window_bounds = array<i64: 5, 72, 128>}, {pipeline_mode = #tpu.pipeline_mode<synchronous>, transform_indices = @transform_6, window_bounds = array<i64: 1, 128>}, {pipeline_mode = #tpu.pipeline_mode<synchronous>, transform_indices = @transform_7, window_bounds = array<i64: 4, 7>}, {pipeline_mode = #tpu.pipeline_mode<synchronous>, transform_indices = @transform_8, window_bounds = array<i64: 127, 64>}, {pipeline_mode = #tpu.pipeline_mode<synchronous>, transform_indices = @transform_9, window_bounds = array<i64: 4, 64, 120>}, {pipeline_mode = #tpu.pipeline_mode<synchronous>, transform_indices = @transform_10, window_bounds = array<i64: 1, 120>}, {pipeline_mode = #tpu.pipeline_mode<synchronous>, transform_indices = @transform_11, window_bounds = array<i64: 120, 84>}, {pipeline_mode = #tpu.pipeline_mode<synchronous>, transform_indices = @transform_12, window_bounds = array<i64: 1, 84>}, {pipeline_mode = #tpu.pipeline_mode<synchronous>, transform_indices = @transform_13, window_bounds = array<i64: 84, 128>}, {pipeline_mode = #tpu.pipeline_mode<synchronous>, transform_indices = @transform_14, window_bounds = array<i64: 1, 128>}, {transform_indices = @transform_15, window_bounds = array<i64: 2, 128>}]} {
    %c0 = arith.constant 0 : index
    %c0_0 = arith.constant 0 : index
    %c0_1 = arith.constant 0 : index
    %c0_2 = arith.constant 0 : index
    %0 = vector.load %arg1[%c0, %c0_0, %c0_1, %c0_2] : memref<2x1x28x28xf32, #tpu.memory_space<vmem>>, vector<1x1x28x28xf32>
    %1 = vector.shape_cast %0 : vector<1x1x28x28xf32> to vector<28x28xf32>
    %2 = vector.extract_strided_slice %1 {offsets = [0, 0], sizes = [24, 28], strides = [1, 1]} : vector<28x28xf32> to vector<24x28xf32>
    %c0_3 = arith.constant 0 : index
    %c0_4 = arith.constant 0 : index
    %c0_5 = arith.constant 0 : index
    %3 = vector.load %arg2[%c0_3, %c0_4, %c0_5] : memref<5x28x144xf32, #tpu.memory_space<vmem>>, vector<1x28x144xf32>
    %4 = vector.shape_cast %3 : vector<1x28x144xf32> to vector<28x144xf32>
    %cst = arith.constant dense<0.000000e+00> : vector<24x144xf32>
    %5 = tpu.matmul %2, %4, %cst {dimension_numbers = #tpu.dot_dimension_numbers<[1], [0], [0], [1], [0, 0, 1, 1], [], []>} : vector<24x28xf32>, vector<28x144xf32>, vector<24x144xf32> -> vector<24x144xf32>
    %6 = vector.extract_strided_slice %1 {offsets = [1, 0], sizes = [24, 28], strides = [1, 1]} : vector<28x28xf32> to vector<24x28xf32>
    %c1 = arith.constant 1 : index
    %c0_6 = arith.constant 0 : index
    %c0_7 = arith.constant 0 : index
    %7 = vector.load %arg2[%c1, %c0_6, %c0_7] : memref<5x28x144xf32, #tpu.memory_space<vmem>>, vector<1x28x144xf32>
    %8 = vector.shape_cast %7 : vector<1x28x144xf32> to vector<28x144xf32>
    %cst_8 = arith.constant dense<0.000000e+00> : vector<24x144xf32>
    %9 = tpu.matmul %6, %8, %cst_8 {dimension_numbers = #tpu.dot_dimension_numbers<[1], [0], [0], [1], [0, 0, 1, 1], [], []>} : vector<24x28xf32>, vector<28x144xf32>, vector<24x144xf32> -> vector<24x144xf32>
    %10 = arith.addf %5, %9 : vector<24x144xf32>
    %11 = vector.extract_strided_slice %1 {offsets = [2, 0], sizes = [24, 28], strides = [1, 1]} : vector<28x28xf32> to vector<24x28xf32>
    %c2 = arith.constant 2 : index
    %c0_9 = arith.constant 0 : index
    %c0_10 = arith.constant 0 : index
    %12 = vector.load %arg2[%c2, %c0_9, %c0_10] : memref<5x28x144xf32, #tpu.memory_space<vmem>>, vector<1x28x144xf32>
    %13 = vector.shape_cast %12 : vector<1x28x144xf32> to vector<28x144xf32>
    %cst_11 = arith.constant dense<0.000000e+00> : vector<24x144xf32>
    %14 = tpu.matmul %11, %13, %cst_11 {dimension_numbers = #tpu.dot_dimension_numbers<[1], [0], [0], [1], [0, 0, 1, 1], [], []>} : vector<24x28xf32>, vector<28x144xf32>, vector<24x144xf32> -> vector<24x144xf32>
    %15 = arith.addf %10, %14 : vector<24x144xf32>
    %16 = vector.extract_strided_slice %1 {offsets = [3, 0], sizes = [24, 28], strides = [1, 1]} : vector<28x28xf32> to vector<24x28xf32>
    %c3 = arith.constant 3 : index
    %c0_12 = arith.constant 0 : index
    %c0_13 = arith.constant 0 : index
    %17 = vector.load %arg2[%c3, %c0_12, %c0_13] : memref<5x28x144xf32, #tpu.memory_space<vmem>>, vector<1x28x144xf32>
    %18 = vector.shape_cast %17 : vector<1x28x144xf32> to vector<28x144xf32>
    %cst_14 = arith.constant dense<0.000000e+00> : vector<24x144xf32>
    %19 = tpu.matmul %16, %18, %cst_14 {dimension_numbers = #tpu.dot_dimension_numbers<[1], [0], [0], [1], [0, 0, 1, 1], [], []>} : vector<24x28xf32>, vector<28x144xf32>, vector<24x144xf32> -> vector<24x144xf32>
    %20 = arith.addf %15, %19 : vector<24x144xf32>
    %21 = vector.extract_strided_slice %1 {offsets = [4, 0], sizes = [24, 28], strides = [1, 1]} : vector<28x28xf32> to vector<24x28xf32>
    %c4 = arith.constant 4 : index
    %c0_15 = arith.constant 0 : index
    %c0_16 = arith.constant 0 : index
    %22 = vector.load %arg2[%c4, %c0_15, %c0_16] : memref<5x28x144xf32, #tpu.memory_space<vmem>>, vector<1x28x144xf32>
    %23 = vector.shape_cast %22 : vector<1x28x144xf32> to vector<28x144xf32>
    %cst_17 = arith.constant dense<0.000000e+00> : vector<24x144xf32>
    %24 = tpu.matmul %21, %23, %cst_17 {dimension_numbers = #tpu.dot_dimension_numbers<[1], [0], [0], [1], [0, 0, 1, 1], [], []>} : vector<24x28xf32>, vector<28x144xf32>, vector<24x144xf32> -> vector<24x144xf32>
    %25 = arith.addf %20, %24 : vector<24x144xf32>
    %c0_18 = arith.constant 0 : index
    %c0_19 = arith.constant 0 : index
    %26 = vector.load %arg3[%c0_18, %c0_19] : memref<1x144xf32, #tpu.memory_space<vmem>>, vector<1x144xf32>
    %27 = vector.broadcast %26 : vector<1x144xf32> to vector<24x144xf32>
    %28 = arith.addf %25, %27 : vector<24x144xf32>
    %cst_20 = arith.constant 0.000000e+00 : f32
    %29 = vector.broadcast %cst_20 : f32 to vector<24x144xf32>
    %30 = arith.maximumf %28, %29 : vector<24x144xf32>
    %31 = vector.extract_strided_slice %30 {offsets = [0, 0], sizes = [23, 143], strides = [1, 1]} : vector<24x144xf32> to vector<23x143xf32>
    %32 = vector.extract_strided_slice %30 {offsets = [0, 1], sizes = [23, 143], strides = [1, 1]} : vector<24x144xf32> to vector<23x143xf32>
    %33 = arith.maximumf %31, %32 : vector<23x143xf32>
    %34 = vector.extract_strided_slice %30 {offsets = [1, 0], sizes = [23, 143], strides = [1, 1]} : vector<24x144xf32> to vector<23x143xf32>
    %35 = vector.extract_strided_slice %30 {offsets = [1, 1], sizes = [23, 143], strides = [1, 1]} : vector<24x144xf32> to vector<23x143xf32>
    %36 = arith.maximumf %34, %35 : vector<23x143xf32>
    %37 = arith.maximumf %33, %36 : vector<23x143xf32>
    %c0_21 = arith.constant 0 : index
    %c0_22 = arith.constant 0 : index
    %38 = vector.load %arg4[%c0_21, %c0_22] : memref<12x23xf32, #tpu.memory_space<vmem>>, vector<12x23xf32>
    %c0_23 = arith.constant 0 : index
    %c0_24 = arith.constant 0 : index
    %39 = vector.load %arg5[%c0_23, %c0_24] : memref<143x72xf32, #tpu.memory_space<vmem>>, vector<143x72xf32>
    %cst_25 = arith.constant dense<0.000000e+00> : vector<23x72xf32>
    %40 = tpu.matmul %37, %39, %cst_25 {dimension_numbers = #tpu.dot_dimension_numbers<[1], [0], [0], [1], [0, 0, 1, 1], [], []>} : vector<23x143xf32>, vector<143x72xf32>, vector<23x72xf32> -> vector<23x72xf32>
    %cst_26 = arith.constant dense<0.000000e+00> : vector<12x72xf32>
    %41 = tpu.matmul %38, %40, %cst_26 {dimension_numbers = #tpu.dot_dimension_numbers<[1], [0], [0], [1], [0, 0, 1, 1], [], []>} : vector<12x23xf32>, vector<23x72xf32>, vector<12x72xf32> -> vector<12x72xf32>
    %42 = vector.extract_strided_slice %41 {offsets = [0, 0], sizes = [8, 72], strides = [1, 1]} : vector<12x72xf32> to vector<8x72xf32>
    %c0_27 = arith.constant 0 : index
    %c0_28 = arith.constant 0 : index
    %c0_29 = arith.constant 0 : index
    %43 = vector.load %arg6[%c0_27, %c0_28, %c0_29] : memref<5x72x128xf32, #tpu.memory_space<vmem>>, vector<1x72x128xf32>
    %44 = vector.shape_cast %43 : vector<1x72x128xf32> to vector<72x128xf32>
    %cst_30 = arith.constant dense<0.000000e+00> : vector<8x128xf32>
    %45 = tpu.matmul %42, %44, %cst_30 {dimension_numbers = #tpu.dot_dimension_numbers<[1], [0], [0], [1], [0, 0, 1, 1], [], []>} : vector<8x72xf32>, vector<72x128xf32>, vector<8x128xf32> -> vector<8x128xf32>
    %46 = vector.extract_strided_slice %41 {offsets = [1, 0], sizes = [8, 72], strides = [1, 1]} : vector<12x72xf32> to vector<8x72xf32>
    %c1_31 = arith.constant 1 : index
    %c0_32 = arith.constant 0 : index
    %c0_33 = arith.constant 0 : index
    %47 = vector.load %arg6[%c1_31, %c0_32, %c0_33] : memref<5x72x128xf32, #tpu.memory_space<vmem>>, vector<1x72x128xf32>
    %48 = vector.shape_cast %47 : vector<1x72x128xf32> to vector<72x128xf32>
    %cst_34 = arith.constant dense<0.000000e+00> : vector<8x128xf32>
    %49 = tpu.matmul %46, %48, %cst_34 {dimension_numbers = #tpu.dot_dimension_numbers<[1], [0], [0], [1], [0, 0, 1, 1], [], []>} : vector<8x72xf32>, vector<72x128xf32>, vector<8x128xf32> -> vector<8x128xf32>
    %50 = arith.addf %45, %49 : vector<8x128xf32>
    %51 = vector.extract_strided_slice %41 {offsets = [2, 0], sizes = [8, 72], strides = [1, 1]} : vector<12x72xf32> to vector<8x72xf32>
    %c2_35 = arith.constant 2 : index
    %c0_36 = arith.constant 0 : index
    %c0_37 = arith.constant 0 : index
    %52 = vector.load %arg6[%c2_35, %c0_36, %c0_37] : memref<5x72x128xf32, #tpu.memory_space<vmem>>, vector<1x72x128xf32>
    %53 = vector.shape_cast %52 : vector<1x72x128xf32> to vector<72x128xf32>
    %cst_38 = arith.constant dense<0.000000e+00> : vector<8x128xf32>
    %54 = tpu.matmul %51, %53, %cst_38 {dimension_numbers = #tpu.dot_dimension_numbers<[1], [0], [0], [1], [0, 0, 1, 1], [], []>} : vector<8x72xf32>, vector<72x128xf32>, vector<8x128xf32> -> vector<8x128xf32>
    %55 = arith.addf %50, %54 : vector<8x128xf32>
    %56 = vector.extract_strided_slice %41 {offsets = [3, 0], sizes = [8, 72], strides = [1, 1]} : vector<12x72xf32> to vector<8x72xf32>
    %c3_39 = arith.constant 3 : index
    %c0_40 = arith.constant 0 : index
    %c0_41 = arith.constant 0 : index
    %57 = vector.load %arg6[%c3_39, %c0_40, %c0_41] : memref<5x72x128xf32, #tpu.memory_space<vmem>>, vector<1x72x128xf32>
    %58 = vector.shape_cast %57 : vector<1x72x128xf32> to vector<72x128xf32>
    %cst_42 = arith.constant dense<0.000000e+00> : vector<8x128xf32>
    %59 = tpu.matmul %56, %58, %cst_42 {dimension_numbers = #tpu.dot_dimension_numbers<[1], [0], [0], [1], [0, 0, 1, 1], [], []>} : vector<8x72xf32>, vector<72x128xf32>, vector<8x128xf32> -> vector<8x128xf32>
    %60 = arith.addf %55, %59 : vector<8x128xf32>
    %61 = vector.extract_strided_slice %41 {offsets = [4, 0], sizes = [8, 72], strides = [1, 1]} : vector<12x72xf32> to vector<8x72xf32>
    %c4_43 = arith.constant 4 : index
    %c0_44 = arith.constant 0 : index
    %c0_45 = arith.constant 0 : index
    %62 = vector.load %arg6[%c4_43, %c0_44, %c0_45] : memref<5x72x128xf32, #tpu.memory_space<vmem>>, vector<1x72x128xf32>
    %63 = vector.shape_cast %62 : vector<1x72x128xf32> to vector<72x128xf32>
    %cst_46 = arith.constant dense<0.000000e+00> : vector<8x128xf32>
    %64 = tpu.matmul %61, %63, %cst_46 {dimension_numbers = #tpu.dot_dimension_numbers<[1], [0], [0], [1], [0, 0, 1, 1], [], []>} : vector<8x72xf32>, vector<72x128xf32>, vector<8x128xf32> -> vector<8x128xf32>
    %65 = arith.addf %60, %64 : vector<8x128xf32>
    %c0_47 = arith.constant 0 : index
    %c0_48 = arith.constant 0 : index
    %66 = vector.load %arg7[%c0_47, %c0_48] : memref<1x128xf32, #tpu.memory_space<vmem>>, vector<1x128xf32>
    %67 = vector.broadcast %66 : vector<1x128xf32> to vector<8x128xf32>
    %68 = arith.addf %65, %67 : vector<8x128xf32>
    %cst_49 = arith.constant 0.000000e+00 : f32
    %69 = vector.broadcast %cst_49 : f32 to vector<8x128xf32>
    %70 = arith.maximumf %68, %69 : vector<8x128xf32>
    %71 = vector.extract_strided_slice %70 {offsets = [0, 0], sizes = [7, 127], strides = [1, 1]} : vector<8x128xf32> to vector<7x127xf32>
    %72 = vector.extract_strided_slice %70 {offsets = [0, 1], sizes = [7, 127], strides = [1, 1]} : vector<8x128xf32> to vector<7x127xf32>
    %73 = arith.maximumf %71, %72 : vector<7x127xf32>
    %74 = vector.extract_strided_slice %70 {offsets = [1, 0], sizes = [7, 127], strides = [1, 1]} : vector<8x128xf32> to vector<7x127xf32>
    %75 = vector.extract_strided_slice %70 {offsets = [1, 1], sizes = [7, 127], strides = [1, 1]} : vector<8x128xf32> to vector<7x127xf32>
    %76 = arith.maximumf %74, %75 : vector<7x127xf32>
    %77 = arith.maximumf %73, %76 : vector<7x127xf32>
    %c0_50 = arith.constant 0 : index
    %c0_51 = arith.constant 0 : index
    %78 = vector.load %arg8[%c0_50, %c0_51] : memref<4x7xf32, #tpu.memory_space<vmem>>, vector<4x7xf32>
    %c0_52 = arith.constant 0 : index
    %c0_53 = arith.constant 0 : index
    %79 = vector.load %arg9[%c0_52, %c0_53] : memref<127x64xf32, #tpu.memory_space<vmem>>, vector<127x64xf32>
    %cst_54 = arith.constant dense<0.000000e+00> : vector<7x64xf32>
    %80 = tpu.matmul %77, %79, %cst_54 {dimension_numbers = #tpu.dot_dimension_numbers<[1], [0], [0], [1], [0, 0, 1, 1], [], []>} : vector<7x127xf32>, vector<127x64xf32>, vector<7x64xf32> -> vector<7x64xf32>
    %cst_55 = arith.constant dense<0.000000e+00> : vector<4x64xf32>
    %81 = tpu.matmul %78, %80, %cst_55 {dimension_numbers = #tpu.dot_dimension_numbers<[1], [0], [0], [1], [0, 0, 1, 1], [], []>} : vector<4x7xf32>, vector<7x64xf32>, vector<4x64xf32> -> vector<4x64xf32>
    %82 = vector.extract_strided_slice %81 {offsets = [0, 0], sizes = [1, 64], strides = [1, 1]} : vector<4x64xf32> to vector<1x64xf32>
    %c0_56 = arith.constant 0 : index
    %c0_57 = arith.constant 0 : index
    %83 = vector.load %arg17[%c0_56, %c0_57] : memref<8x64xf32, #tpu.memory_space<vmem>>, vector<1x64xf32>
    tpu.vector_store %arg17[%c0_56, %c0_57], %82 {strides = array<i32>} : memref<8x64xf32, #tpu.memory_space<vmem>>, vector<1x64xf32>,
    %84 = vector.extract_strided_slice %81 {offsets = [1, 0], sizes = [1, 64], strides = [1, 1]} : vector<4x64xf32> to vector<1x64xf32>
    %c2_58 = arith.constant 2 : index
    %c0_59 = arith.constant 0 : index
    %85 = vector.load %arg17[%c2_58, %c0_59] : memref<8x64xf32, #tpu.memory_space<vmem>>, vector<1x64xf32>
    tpu.vector_store %arg17[%c2_58, %c0_59], %84 {strides = array<i32>} : memref<8x64xf32, #tpu.memory_space<vmem>>, vector<1x64xf32>,
    %86 = vector.extract_strided_slice %81 {offsets = [2, 0], sizes = [1, 64], strides = [1, 1]} : vector<4x64xf32> to vector<1x64xf32>
    %c4_60 = arith.constant 4 : index
    %c0_61 = arith.constant 0 : index
    %87 = vector.load %arg17[%c4_60, %c0_61] : memref<8x64xf32, #tpu.memory_space<vmem>>, vector<1x64xf32>
    tpu.vector_store %arg17[%c4_60, %c0_61], %86 {strides = array<i32>} : memref<8x64xf32, #tpu.memory_space<vmem>>, vector<1x64xf32>,
    %88 = vector.extract_strided_slice %81 {offsets = [3, 0], sizes = [1, 64], strides = [1, 1]} : vector<4x64xf32> to vector<1x64xf32>
    %c6 = arith.constant 6 : index
    %c0_62 = arith.constant 0 : index
    %89 = vector.load %arg17[%c6, %c0_62] : memref<8x64xf32, #tpu.memory_space<vmem>>, vector<1x64xf32>
    tpu.vector_store %arg17[%c6, %c0_62], %88 {strides = array<i32>} : memref<8x64xf32, #tpu.memory_space<vmem>>, vector<1x64xf32>,
    %c1_63 = arith.constant 1 : index
    %c0_64 = arith.constant 0 : index
    %c0_65 = arith.constant 0 : index
    %c0_66 = arith.constant 0 : index
    %90 = vector.load %arg1[%c1_63, %c0_64, %c0_65, %c0_66] : memref<2x1x28x28xf32, #tpu.memory_space<vmem>>, vector<1x1x28x28xf32>
    %91 = vector.shape_cast %90 : vector<1x1x28x28xf32> to vector<28x28xf32>
    %92 = vector.extract_strided_slice %91 {offsets = [0, 0], sizes = [24, 28], strides = [1, 1]} : vector<28x28xf32> to vector<24x28xf32>
    %c0_67 = arith.constant 0 : index
    %c0_68 = arith.constant 0 : index
    %c0_69 = arith.constant 0 : index
    %93 = vector.load %arg2[%c0_67, %c0_68, %c0_69] : memref<5x28x144xf32, #tpu.memory_space<vmem>>, vector<1x28x144xf32>
    %94 = vector.shape_cast %93 : vector<1x28x144xf32> to vector<28x144xf32>
    %cst_70 = arith.constant dense<0.000000e+00> : vector<24x144xf32>
    %95 = tpu.matmul %92, %94, %cst_70 {dimension_numbers = #tpu.dot_dimension_numbers<[1], [0], [0], [1], [0, 0, 1, 1], [], []>} : vector<24x28xf32>, vector<28x144xf32>, vector<24x144xf32> -> vector<24x144xf32>
    %96 = vector.extract_strided_slice %91 {offsets = [1, 0], sizes = [24, 28], strides = [1, 1]} : vector<28x28xf32> to vector<24x28xf32>
    %c1_71 = arith.constant 1 : index
    %c0_72 = arith.constant 0 : index
    %c0_73 = arith.constant 0 : index
    %97 = vector.load %arg2[%c1_71, %c0_72, %c0_73] : memref<5x28x144xf32, #tpu.memory_space<vmem>>, vector<1x28x144xf32>
    %98 = vector.shape_cast %97 : vector<1x28x144xf32> to vector<28x144xf32>
    %cst_74 = arith.constant dense<0.000000e+00> : vector<24x144xf32>
    %99 = tpu.matmul %96, %98, %cst_74 {dimension_numbers = #tpu.dot_dimension_numbers<[1], [0], [0], [1], [0, 0, 1, 1], [], []>} : vector<24x28xf32>, vector<28x144xf32>, vector<24x144xf32> -> vector<24x144xf32>
    %100 = arith.addf %95, %99 : vector<24x144xf32>
    %101 = vector.extract_strided_slice %91 {offsets = [2, 0], sizes = [24, 28], strides = [1, 1]} : vector<28x28xf32> to vector<24x28xf32>
    %c2_75 = arith.constant 2 : index
    %c0_76 = arith.constant 0 : index
    %c0_77 = arith.constant 0 : index
    %102 = vector.load %arg2[%c2_75, %c0_76, %c0_77] : memref<5x28x144xf32, #tpu.memory_space<vmem>>, vector<1x28x144xf32>
    %103 = vector.shape_cast %102 : vector<1x28x144xf32> to vector<28x144xf32>
    %cst_78 = arith.constant dense<0.000000e+00> : vector<24x144xf32>
    %104 = tpu.matmul %101, %103, %cst_78 {dimension_numbers = #tpu.dot_dimension_numbers<[1], [0], [0], [1], [0, 0, 1, 1], [], []>} : vector<24x28xf32>, vector<28x144xf32>, vector<24x144xf32> -> vector<24x144xf32>
    %105 = arith.addf %100, %104 : vector<24x144xf32>
    %106 = vector.extract_strided_slice %91 {offsets = [3, 0], sizes = [24, 28], strides = [1, 1]} : vector<28x28xf32> to vector<24x28xf32>
    %c3_79 = arith.constant 3 : index
    %c0_80 = arith.constant 0 : index
    %c0_81 = arith.constant 0 : index
    %107 = vector.load %arg2[%c3_79, %c0_80, %c0_81] : memref<5x28x144xf32, #tpu.memory_space<vmem>>, vector<1x28x144xf32>
    %108 = vector.shape_cast %107 : vector<1x28x144xf32> to vector<28x144xf32>
    %cst_82 = arith.constant dense<0.000000e+00> : vector<24x144xf32>
    %109 = tpu.matmul %106, %108, %cst_82 {dimension_numbers = #tpu.dot_dimension_numbers<[1], [0], [0], [1], [0, 0, 1, 1], [], []>} : vector<24x28xf32>, vector<28x144xf32>, vector<24x144xf32> -> vector<24x144xf32>
    %110 = arith.addf %105, %109 : vector<24x144xf32>
    %111 = vector.extract_strided_slice %91 {offsets = [4, 0], sizes = [24, 28], strides = [1, 1]} : vector<28x28xf32> to vector<24x28xf32>
    %c4_83 = arith.constant 4 : index
    %c0_84 = arith.constant 0 : index
    %c0_85 = arith.constant 0 : index
    %112 = vector.load %arg2[%c4_83, %c0_84, %c0_85] : memref<5x28x144xf32, #tpu.memory_space<vmem>>, vector<1x28x144xf32>
    %113 = vector.shape_cast %112 : vector<1x28x144xf32> to vector<28x144xf32>
    %cst_86 = arith.constant dense<0.000000e+00> : vector<24x144xf32>
    %114 = tpu.matmul %111, %113, %cst_86 {dimension_numbers = #tpu.dot_dimension_numbers<[1], [0], [0], [1], [0, 0, 1, 1], [], []>} : vector<24x28xf32>, vector<28x144xf32>, vector<24x144xf32> -> vector<24x144xf32>
    %115 = arith.addf %110, %114 : vector<24x144xf32>
    %c0_87 = arith.constant 0 : index
    %c0_88 = arith.constant 0 : index
    %116 = vector.load %arg3[%c0_87, %c0_88] : memref<1x144xf32, #tpu.memory_space<vmem>>, vector<1x144xf32>
    %117 = vector.broadcast %116 : vector<1x144xf32> to vector<24x144xf32>
    %118 = arith.addf %115, %117 : vector<24x144xf32>
    %cst_89 = arith.constant 0.000000e+00 : f32
    %119 = vector.broadcast %cst_89 : f32 to vector<24x144xf32>
    %120 = arith.maximumf %118, %119 : vector<24x144xf32>
    %121 = vector.extract_strided_slice %120 {offsets = [0, 0], sizes = [23, 143], strides = [1, 1]} : vector<24x144xf32> to vector<23x143xf32>
    %122 = vector.extract_strided_slice %120 {offsets = [0, 1], sizes = [23, 143], strides = [1, 1]} : vector<24x144xf32> to vector<23x143xf32>
    %123 = arith.maximumf %121, %122 : vector<23x143xf32>
    %124 = vector.extract_strided_slice %120 {offsets = [1, 0], sizes = [23, 143], strides = [1, 1]} : vector<24x144xf32> to vector<23x143xf32>
    %125 = vector.extract_strided_slice %120 {offsets = [1, 1], sizes = [23, 143], strides = [1, 1]} : vector<24x144xf32> to vector<23x143xf32>
    %126 = arith.maximumf %124, %125 : vector<23x143xf32>
    %127 = arith.maximumf %123, %126 : vector<23x143xf32>
    %c0_90 = arith.constant 0 : index
    %c0_91 = arith.constant 0 : index
    %128 = vector.load %arg4[%c0_90, %c0_91] : memref<12x23xf32, #tpu.memory_space<vmem>>, vector<12x23xf32>
    %c0_92 = arith.constant 0 : index
    %c0_93 = arith.constant 0 : index
    %129 = vector.load %arg5[%c0_92, %c0_93] : memref<143x72xf32, #tpu.memory_space<vmem>>, vector<143x72xf32>
    %cst_94 = arith.constant dense<0.000000e+00> : vector<23x72xf32>
    %130 = tpu.matmul %127, %129, %cst_94 {dimension_numbers = #tpu.dot_dimension_numbers<[1], [0], [0], [1], [0, 0, 1, 1], [], []>} : vector<23x143xf32>, vector<143x72xf32>, vector<23x72xf32> -> vector<23x72xf32>
    %cst_95 = arith.constant dense<0.000000e+00> : vector<12x72xf32>
    %131 = tpu.matmul %128, %130, %cst_95 {dimension_numbers = #tpu.dot_dimension_numbers<[1], [0], [0], [1], [0, 0, 1, 1], [], []>} : vector<12x23xf32>, vector<23x72xf32>, vector<12x72xf32> -> vector<12x72xf32>
    %132 = vector.extract_strided_slice %131 {offsets = [0, 0], sizes = [8, 72], strides = [1, 1]} : vector<12x72xf32> to vector<8x72xf32>
    %c0_96 = arith.constant 0 : index
    %c0_97 = arith.constant 0 : index
    %c0_98 = arith.constant 0 : index
    %133 = vector.load %arg6[%c0_96, %c0_97, %c0_98] : memref<5x72x128xf32, #tpu.memory_space<vmem>>, vector<1x72x128xf32>
    %134 = vector.shape_cast %133 : vector<1x72x128xf32> to vector<72x128xf32>
    %cst_99 = arith.constant dense<0.000000e+00> : vector<8x128xf32>
    %135 = tpu.matmul %132, %134, %cst_99 {dimension_numbers = #tpu.dot_dimension_numbers<[1], [0], [0], [1], [0, 0, 1, 1], [], []>} : vector<8x72xf32>, vector<72x128xf32>, vector<8x128xf32> -> vector<8x128xf32>
    %136 = vector.extract_strided_slice %131 {offsets = [1, 0], sizes = [8, 72], strides = [1, 1]} : vector<12x72xf32> to vector<8x72xf32>
    %c1_100 = arith.constant 1 : index
    %c0_101 = arith.constant 0 : index
    %c0_102 = arith.constant 0 : index
    %137 = vector.load %arg6[%c1_100, %c0_101, %c0_102] : memref<5x72x128xf32, #tpu.memory_space<vmem>>, vector<1x72x128xf32>
    %138 = vector.shape_cast %137 : vector<1x72x128xf32> to vector<72x128xf32>
    %cst_103 = arith.constant dense<0.000000e+00> : vector<8x128xf32>
    %139 = tpu.matmul %136, %138, %cst_103 {dimension_numbers = #tpu.dot_dimension_numbers<[1], [0], [0], [1], [0, 0, 1, 1], [], []>} : vector<8x72xf32>, vector<72x128xf32>, vector<8x128xf32> -> vector<8x128xf32>
    %140 = arith.addf %135, %139 : vector<8x128xf32>
    %141 = vector.extract_strided_slice %131 {offsets = [2, 0], sizes = [8, 72], strides = [1, 1]} : vector<12x72xf32> to vector<8x72xf32>
    %c2_104 = arith.constant 2 : index
    %c0_105 = arith.constant 0 : index
    %c0_106 = arith.constant 0 : index
    %142 = vector.load %arg6[%c2_104, %c0_105, %c0_106] : memref<5x72x128xf32, #tpu.memory_space<vmem>>, vector<1x72x128xf32>
    %143 = vector.shape_cast %142 : vector<1x72x128xf32> to vector<72x128xf32>
    %cst_107 = arith.constant dense<0.000000e+00> : vector<8x128xf32>
    %144 = tpu.matmul %141, %143, %cst_107 {dimension_numbers = #tpu.dot_dimension_numbers<[1], [0], [0], [1], [0, 0, 1, 1], [], []>} : vector<8x72xf32>, vector<72x128xf32>, vector<8x128xf32> -> vector<8x128xf32>
    %145 = arith.addf %140, %144 : vector<8x128xf32>
    %146 = vector.extract_strided_slice %131 {offsets = [3, 0], sizes = [8, 72], strides = [1, 1]} : vector<12x72xf32> to vector<8x72xf32>
    %c3_108 = arith.constant 3 : index
    %c0_109 = arith.constant 0 : index
    %c0_110 = arith.constant 0 : index
    %147 = vector.load %arg6[%c3_108, %c0_109, %c0_110] : memref<5x72x128xf32, #tpu.memory_space<vmem>>, vector<1x72x128xf32>
    %148 = vector.shape_cast %147 : vector<1x72x128xf32> to vector<72x128xf32>
    %cst_111 = arith.constant dense<0.000000e+00> : vector<8x128xf32>
    %149 = tpu.matmul %146, %148, %cst_111 {dimension_numbers = #tpu.dot_dimension_numbers<[1], [0], [0], [1], [0, 0, 1, 1], [], []>} : vector<8x72xf32>, vector<72x128xf32>, vector<8x128xf32> -> vector<8x128xf32>
    %150 = arith.addf %145, %149 : vector<8x128xf32>
    %151 = vector.extract_strided_slice %131 {offsets = [4, 0], sizes = [8, 72], strides = [1, 1]} : vector<12x72xf32> to vector<8x72xf32>
    %c4_112 = arith.constant 4 : index
    %c0_113 = arith.constant 0 : index
    %c0_114 = arith.constant 0 : index
    %152 = vector.load %arg6[%c4_112, %c0_113, %c0_114] : memref<5x72x128xf32, #tpu.memory_space<vmem>>, vector<1x72x128xf32>
    %153 = vector.shape_cast %152 : vector<1x72x128xf32> to vector<72x128xf32>
    %cst_115 = arith.constant dense<0.000000e+00> : vector<8x128xf32>
    %154 = tpu.matmul %151, %153, %cst_115 {dimension_numbers = #tpu.dot_dimension_numbers<[1], [0], [0], [1], [0, 0, 1, 1], [], []>} : vector<8x72xf32>, vector<72x128xf32>, vector<8x128xf32> -> vector<8x128xf32>
    %155 = arith.addf %150, %154 : vector<8x128xf32>
    %c0_116 = arith.constant 0 : index
    %c0_117 = arith.constant 0 : index
    %156 = vector.load %arg7[%c0_116, %c0_117] : memref<1x128xf32, #tpu.memory_space<vmem>>, vector<1x128xf32>
    %157 = vector.broadcast %156 : vector<1x128xf32> to vector<8x128xf32>
    %158 = arith.addf %155, %157 : vector<8x128xf32>
    %cst_118 = arith.constant 0.000000e+00 : f32
    %159 = vector.broadcast %cst_118 : f32 to vector<8x128xf32>
    %160 = arith.maximumf %158, %159 : vector<8x128xf32>
    %161 = vector.extract_strided_slice %160 {offsets = [0, 0], sizes = [7, 127], strides = [1, 1]} : vector<8x128xf32> to vector<7x127xf32>
    %162 = vector.extract_strided_slice %160 {offsets = [0, 1], sizes = [7, 127], strides = [1, 1]} : vector<8x128xf32> to vector<7x127xf32>
    %163 = arith.maximumf %161, %162 : vector<7x127xf32>
    %164 = vector.extract_strided_slice %160 {offsets = [1, 0], sizes = [7, 127], strides = [1, 1]} : vector<8x128xf32> to vector<7x127xf32>
    %165 = vector.extract_strided_slice %160 {offsets = [1, 1], sizes = [7, 127], strides = [1, 1]} : vector<8x128xf32> to vector<7x127xf32>
    %166 = arith.maximumf %164, %165 : vector<7x127xf32>
    %167 = arith.maximumf %163, %166 : vector<7x127xf32>
    %c0_119 = arith.constant 0 : index
    %c0_120 = arith.constant 0 : index
    %168 = vector.load %arg8[%c0_119, %c0_120] : memref<4x7xf32, #tpu.memory_space<vmem>>, vector<4x7xf32>
    %c0_121 = arith.constant 0 : index
    %c0_122 = arith.constant 0 : index
    %169 = vector.load %arg9[%c0_121, %c0_122] : memref<127x64xf32, #tpu.memory_space<vmem>>, vector<127x64xf32>
    %cst_123 = arith.constant dense<0.000000e+00> : vector<7x64xf32>
    %170 = tpu.matmul %167, %169, %cst_123 {dimension_numbers = #tpu.dot_dimension_numbers<[1], [0], [0], [1], [0, 0, 1, 1], [], []>} : vector<7x127xf32>, vector<127x64xf32>, vector<7x64xf32> -> vector<7x64xf32>
    %cst_124 = arith.constant dense<0.000000e+00> : vector<4x64xf32>
    %171 = tpu.matmul %168, %170, %cst_124 {dimension_numbers = #tpu.dot_dimension_numbers<[1], [0], [0], [1], [0, 0, 1, 1], [], []>} : vector<4x7xf32>, vector<7x64xf32>, vector<4x64xf32> -> vector<4x64xf32>
    %172 = vector.extract_strided_slice %171 {offsets = [0, 0], sizes = [1, 64], strides = [1, 1]} : vector<4x64xf32> to vector<1x64xf32>
    %c1_125 = arith.constant 1 : index
    %c0_126 = arith.constant 0 : index
    %173 = vector.load %arg17[%c1_125, %c0_126] : memref<8x64xf32, #tpu.memory_space<vmem>>, vector<1x64xf32>
    tpu.vector_store %arg17[%c1_125, %c0_126], %172 {strides = array<i32>} : memref<8x64xf32, #tpu.memory_space<vmem>>, vector<1x64xf32>,
    %174 = vector.extract_strided_slice %171 {offsets = [1, 0], sizes = [1, 64], strides = [1, 1]} : vector<4x64xf32> to vector<1x64xf32>
    %c3_127 = arith.constant 3 : index
    %c0_128 = arith.constant 0 : index
    %175 = vector.load %arg17[%c3_127, %c0_128] : memref<8x64xf32, #tpu.memory_space<vmem>>, vector<1x64xf32>
    tpu.vector_store %arg17[%c3_127, %c0_128], %174 {strides = array<i32>} : memref<8x64xf32, #tpu.memory_space<vmem>>, vector<1x64xf32>,
    %176 = vector.extract_strided_slice %171 {offsets = [2, 0], sizes = [1, 64], strides = [1, 1]} : vector<4x64xf32> to vector<1x64xf32>
    %c5 = arith.constant 5 : index
    %c0_129 = arith.constant 0 : index
    %177 = vector.load %arg17[%c5, %c0_129] : memref<8x64xf32, #tpu.memory_space<vmem>>, vector<1x64xf32>
    tpu.vector_store %arg17[%c5, %c0_129], %176 {strides = array<i32>} : memref<8x64xf32, #tpu.memory_space<vmem>>, vector<1x64xf32>,
    %178 = vector.extract_strided_slice %171 {offsets = [3, 0], sizes = [1, 64], strides = [1, 1]} : vector<4x64xf32> to vector<1x64xf32>
    %c7 = arith.constant 7 : index
    %c0_130 = arith.constant 0 : index
    %179 = vector.load %arg17[%c7, %c0_130] : memref<8x64xf32, #tpu.memory_space<vmem>>, vector<1x64xf32>
    tpu.vector_store %arg17[%c7, %c0_130], %178 {strides = array<i32>} : memref<8x64xf32, #tpu.memory_space<vmem>>, vector<1x64xf32>,
    %c0_131 = arith.constant 0 : index
    %c0_132 = arith.constant 0 : index
    %180 = vector.load %arg17[%c0_131, %c0_132] : memref<8x64xf32, #tpu.memory_space<vmem>>, vector<2x64xf32>
    %c0_133 = arith.constant 0 : index
    %c0_134 = arith.constant 0 : index
    %c0_135 = arith.constant 0 : index
    %181 = vector.load %arg10[%c0_133, %c0_134, %c0_135] : memref<4x64x120xf32, #tpu.memory_space<vmem>>, vector<1x64x120xf32>
    %182 = vector.shape_cast %181 : vector<1x64x120xf32> to vector<64x120xf32>
    %cst_136 = arith.constant dense<0.000000e+00> : vector<2x120xf32>
    %183 = tpu.matmul %180, %182, %cst_136 {dimension_numbers = #tpu.dot_dimension_numbers<[1], [0], [0], [1], [0, 0, 1, 1], [], []>} : vector<2x64xf32>, vector<64x120xf32>, vector<2x120xf32> -> vector<2x120xf32>
    %c2_137 = arith.constant 2 : index
    %c0_138 = arith.constant 0 : index
    %184 = vector.load %arg17[%c2_137, %c0_138] : memref<8x64xf32, #tpu.memory_space<vmem>>, vector<2x64xf32>
    %c1_139 = arith.constant 1 : index
    %c0_140 = arith.constant 0 : index
    %c0_141 = arith.constant 0 : index
    %185 = vector.load %arg10[%c1_139, %c0_140, %c0_141] : memref<4x64x120xf32, #tpu.memory_space<vmem>>, vector<1x64x120xf32>
    %186 = vector.shape_cast %185 : vector<1x64x120xf32> to vector<64x120xf32>
    %cst_142 = arith.constant dense<0.000000e+00> : vector<2x120xf32>
    %187 = tpu.matmul %184, %186, %cst_142 {dimension_numbers = #tpu.dot_dimension_numbers<[1], [0], [0], [1], [0, 0, 1, 1], [], []>} : vector<2x64xf32>, vector<64x120xf32>, vector<2x120xf32> -> vector<2x120xf32>
    %188 = arith.addf %183, %187 : vector<2x120xf32>
    %c4_143 = arith.constant 4 : index
    %c0_144 = arith.constant 0 : index
    %189 = vector.load %arg17[%c4_143, %c0_144] : memref<8x64xf32, #tpu.memory_space<vmem>>, vector<2x64xf32>
    %c2_145 = arith.constant 2 : index
    %c0_146 = arith.constant 0 : index
    %c0_147 = arith.constant 0 : index
    %190 = vector.load %arg10[%c2_145, %c0_146, %c0_147] : memref<4x64x120xf32, #tpu.memory_space<vmem>>, vector<1x64x120xf32>
    %191 = vector.shape_cast %190 : vector<1x64x120xf32> to vector<64x120xf32>
    %cst_148 = arith.constant dense<0.000000e+00> : vector<2x120xf32>
    %192 = tpu.matmul %189, %191, %cst_148 {dimension_numbers = #tpu.dot_dimension_numbers<[1], [0], [0], [1], [0, 0, 1, 1], [], []>} : vector<2x64xf32>, vector<64x120xf32>, vector<2x120xf32> -> vector<2x120xf32>
    %193 = arith.addf %188, %192 : vector<2x120xf32>
    %c6_149 = arith.constant 6 : index
    %c0_150 = arith.constant 0 : index
    %194 = vector.load %arg17[%c6_149, %c0_150] : memref<8x64xf32, #tpu.memory_space<vmem>>, vector<2x64xf32>
    %c3_151 = arith.constant 3 : index
    %c0_152 = arith.constant 0 : index
    %c0_153 = arith.constant 0 : index
    %195 = vector.load %arg10[%c3_151, %c0_152, %c0_153] : memref<4x64x120xf32, #tpu.memory_space<vmem>>, vector<1x64x120xf32>
    %196 = vector.shape_cast %195 : vector<1x64x120xf32> to vector<64x120xf32>
    %cst_154 = arith.constant dense<0.000000e+00> : vector<2x120xf32>
    %197 = tpu.matmul %194, %196, %cst_154 {dimension_numbers = #tpu.dot_dimension_numbers<[1], [0], [0], [1], [0, 0, 1, 1], [], []>} : vector<2x64xf32>, vector<64x120xf32>, vector<2x120xf32> -> vector<2x120xf32>
    %198 = arith.addf %193, %197 : vector<2x120xf32>
    %c0_155 = arith.constant 0 : index
    %c0_156 = arith.constant 0 : index
    %199 = vector.load %arg11[%c0_155, %c0_156] : memref<1x120xf32, #tpu.memory_space<vmem>>, vector<1x120xf32>
    %200 = vector.broadcast %199 : vector<1x120xf32> to vector<2x120xf32>
    %201 = arith.addf %198, %200 : vector<2x120xf32>
    %cst_157 = arith.constant 0.000000e+00 : f32
    %202 = vector.broadcast %cst_157 : f32 to vector<2x120xf32>
    %203 = arith.maximumf %201, %202 : vector<2x120xf32>
    %c0_158 = arith.constant 0 : index
    %c0_159 = arith.constant 0 : index
    %204 = vector.load %arg12[%c0_158, %c0_159] : memref<120x84xf32, #tpu.memory_space<vmem>>, vector<120x84xf32>
    %cst_160 = arith.constant dense<0.000000e+00> : vector<2x84xf32>
    %205 = tpu.matmul %203, %204, %cst_160 {dimension_numbers = #tpu.dot_dimension_numbers<[1], [0], [0], [1], [0, 0, 1, 1], [], []>} : vector<2x120xf32>, vector<120x84xf32>, vector<2x84xf32> -> vector<2x84xf32>
    %c0_161 = arith.constant 0 : index
    %c0_162 = arith.constant 0 : index
    %206 = vector.load %arg13[%c0_161, %c0_162] : memref<1x84xf32, #tpu.memory_space<vmem>>, vector<1x84xf32>
    %207 = vector.broadcast %206 : vector<1x84xf32> to vector<2x84xf32>
    %208 = arith.addf %205, %207 : vector<2x84xf32>
    %cst_163 = arith.constant 0.000000e+00 : f32
    %209 = vector.broadcast %cst_163 : f32 to vector<2x84xf32>
    %210 = arith.maximumf %208, %209 : vector<2x84xf32>
    %c0_164 = arith.constant 0 : index
    %c0_165 = arith.constant 0 : index
    %211 = vector.load %arg14[%c0_164, %c0_165] : memref<84x128xf32, #tpu.memory_space<vmem>>, vector<84x128xf32>
    %cst_166 = arith.constant dense<0.000000e+00> : vector<2x128xf32>
    %212 = tpu.matmul %210, %211, %cst_166 {dimension_numbers = #tpu.dot_dimension_numbers<[1], [0], [0], [1], [0, 0, 1, 1], [], []>} : vector<2x84xf32>, vector<84x128xf32>, vector<2x128xf32> -> vector<2x128xf32>
    %c0_167 = arith.constant 0 : index
    %c0_168 = arith.constant 0 : index
    %213 = vector.load %arg15[%c0_167, %c0_168] : memref<1x128xf32, #tpu.memory_space<vmem>>, vector<1x128xf32>
    %214 = vector.broadcast %213 : vector<1x128xf32> to vector<2x128xf32>
    %215 = arith.addf %212, %214 : vector<2x128xf32>
    %c0_169 = arith.constant 0 : index
    %c0_170 = arith.constant 0 : index
    %216 = vector.load %arg16[%c0_169, %c0_170] : memref<2x128xf32, #tpu.memory_space<vmem>>, vector<2x128xf32>
    tpu.vector_store %arg16[%c0_169, %c0_170], %215 {strides = array<i32>} : memref<2x128xf32, #tpu.memory_space<vmem>>, vector<2x128xf32>,
    return
  }
  func.func @transform_0(%arg0: i32) -> (i32, i32, i32, i32) {
    %c0_i32 = arith.constant 0 : i32
    %c0_i32_0 = arith.constant 0 : i32
    %c0_i32_1 = arith.constant 0 : i32
    %c0_i32_2 = arith.constant 0 : i32
    return %arg0, %c0_i32, %c0_i32_0, %c0_i32_1 : i32, i32, i32, i32
  }
  func.func @transform_1(%arg0: i32) -> (i32, i32, i32) {
    %c0_i32 = arith.constant 0 : i32
    %c0_i32_0 = arith.constant 0 : i32
    %c0_i32_1 = arith.constant 0 : i32
    %c0_i32_2 = arith.constant 0 : i32
    return %c0_i32, %c0_i32_0, %c0_i32_1 : i32, i32, i32
  }
  func.func @transform_2(%arg0: i32) -> (i32, i32) {
    %c0_i32 = arith.constant 0 : i32
    %c0_i32_0 = arith.constant 0 : i32
    %c0_i32_1 = arith.constant 0 : i32
    return %c0_i32, %c0_i32_0 : i32, i32
  }
  func.func @transform_3(%arg0: i32) -> (i32, i32) {
    %c0_i32 = arith.constant 0 : i32
    %c0_i32_0 = arith.constant 0 : i32
    %c0_i32_1 = arith.constant 0 : i32
    return %c0_i32, %c0_i32_0 : i32, i32
  }
  func.func @transform_4(%arg0: i32) -> (i32, i32) {
    %c0_i32 = arith.constant 0 : i32
    %c0_i32_0 = arith.constant 0 : i32
    %c0_i32_1 = arith.constant 0 : i32
    return %c0_i32, %c0_i32_0 : i32, i32
  }
  func.func @transform_5(%arg0: i32) -> (i32, i32, i32) {
    %c0_i32 = arith.constant 0 : i32
    %c0_i32_0 = arith.constant 0 : i32
    %c0_i32_1 = arith.constant 0 : i32
    %c0_i32_2 = arith.constant 0 : i32
    return %c0_i32, %c0_i32_0, %c0_i32_1 : i32, i32, i32
  }
  func.func @transform_6(%arg0: i32) -> (i32, i32) {
    %c0_i32 = arith.constant 0 : i32
    %c0_i32_0 = arith.constant 0 : i32
    %c0_i32_1 = arith.constant 0 : i32
    return %c0_i32, %c0_i32_0 : i32, i32
  }
  func.func @transform_7(%arg0: i32) -> (i32, i32) {
    %c0_i32 = arith.constant 0 : i32
    %c0_i32_0 = arith.constant 0 : i32
    %c0_i32_1 = arith.constant 0 : i32
    return %c0_i32, %c0_i32_0 : i32, i32
  }
  func.func @transform_8(%arg0: i32) -> (i32, i32) {
    %c0_i32 = arith.constant 0 : i32
    %c0_i32_0 = arith.constant 0 : i32
    %c0_i32_1 = arith.constant 0 : i32
    return %c0_i32, %c0_i32_0 : i32, i32
  }
  func.func @transform_9(%arg0: i32) -> (i32, i32, i32) {
    %c0_i32 = arith.constant 0 : i32
    %c0_i32_0 = arith.constant 0 : i32
    %c0_i32_1 = arith.constant 0 : i32
    %c0_i32_2 = arith.constant 0 : i32
    return %c0_i32, %c0_i32_0, %c0_i32_1 : i32, i32, i32
  }
  func.func @transform_10(%arg0: i32) -> (i32, i32) {
    %c0_i32 = arith.constant 0 : i32
    %c0_i32_0 = arith.constant 0 : i32
    %c0_i32_1 = arith.constant 0 : i32
    return %c0_i32, %c0_i32_0 : i32, i32
  }
  func.func @transform_11(%arg0: i32) -> (i32, i32) {
    %c0_i32 = arith.constant 0 : i32
    %c0_i32_0 = arith.constant 0 : i32
    %c0_i32_1 = arith.constant 0 : i32
    return %c0_i32, %c0_i32_0 : i32, i32
  }
  func.func @transform_12(%arg0: i32) -> (i32, i32) {
    %c0_i32 = arith.constant 0 : i32
    %c0_i32_0 = arith.constant 0 : i32
    %c0_i32_1 = arith.constant 0 : i32
    return %c0_i32, %c0_i32_0 : i32, i32
  }
  func.func @transform_13(%arg0: i32) -> (i32, i32) {
    %c0_i32 = arith.constant 0 : i32
    %c0_i32_0 = arith.constant 0 : i32
    %c0_i32_1 = arith.constant 0 : i32
    return %c0_i32, %c0_i32_0 : i32, i32
  }
  func.func @transform_14(%arg0: i32) -> (i32, i32) {
    %c0_i32 = arith.constant 0 : i32
    %c0_i32_0 = arith.constant 0 : i32
    %c0_i32_1 = arith.constant 0 : i32
    return %c0_i32, %c0_i32_0 : i32, i32
  }
  func.func @transform_15(%arg0: i32) -> (i32, i32) {
    %c0_i32 = arith.constant 0 : i32
    %c0_i32_0 = arith.constant 0 : i32
    return %arg0, %c0_i32 : i32, i32
  }
}

</mosaic_0001>

<llo_original>
// kernel: lenet_forward.1
$region0: #{lenet_forward.1}
  #allocation0 [shape = 'u32[]', space=smem, size = 0x4, offset = 0x4, fixed_abs, tag = 'smem constant byte address 0x4 - core index']
  #allocation1 [shape = 'u32[72,128]{1,0:T(1,128)}', space=vmem, size = 0x9000, scoped, tag = 'internal scratch']
  #allocation2 [shape = 'f32[8,64]{1,0:T(8,128)}', space=vmem, size = 0x1000, scoped, tag = 'scratch operand']
  %s0 = inlined_call_operand.vmem [shape: f32[2,1,28,28], index: 0, kind: input, shape index: {}]
  %s1 = inlined_call_operand.vmem [shape: f32[5,28,144], index: 1, kind: input, shape index: {}]
  %s2 = inlined_call_operand.vmem [shape: f32[1,144], index: 2, kind: input, shape index: {}]
  %s3 = inlined_call_operand.vmem [shape: f32[12,23], index: 3, kind: input, shape index: {}]
  %s4 = inlined_call_operand.hbm [shape: f32[143,72], index: 4, kind: input, shape index: {}]
  %s5 = inlined_call_operand.hbm [shape: f32[5,72,128], index: 5, kind: input, shape index: {}]
  %s6 = inlined_call_operand.vmem [shape: f32[1,128], index: 6, kind: input, shape index: {}]
  %s7 = inlined_call_operand.vmem [shape: f32[4,7], index: 7, kind: input, shape index: {}]
  %s8 = inlined_call_operand.vmem [shape: f32[127,64], index: 8, kind: input, shape index: {}]
  %s9 = inlined_call_operand.hbm [shape: f32[4,64,120], index: 9, kind: input, shape index: {}]
  %s10 = inlined_call_operand.vmem [shape: f32[1,120], index: 10, kind: input, shape index: {}]
  %s11 = inlined_call_operand.vmem [shape: f32[120,84], index: 11, kind: input, shape index: {}]
  %s12 = inlined_call_operand.vmem [shape: f32[1,84], index: 12, kind: input, shape index: {}]
  %s13 = inlined_call_operand.hbm [shape: f32[84,128], index: 13, kind: input, shape index: {}]
  %s14 = inlined_call_operand.vmem [shape: f32[1,128], index: 14, kind: input, shape index: {}]
  %s15 = inlined_call_operand.hbm [shape: f32[2,128], index: 15, kind: output, shape index: {}]
  %s16 = sld [smem:[#allocation0]]
  $region86: #{lenet_forward.1} parent=0
    _
  %s18 = ssub.s32 1, %s16
  %s19 = scalar_select 0, %s18, %s16
  $region1: #{lenet_forward.1} parent=0
    #allocation3 [shape = 'u8[73728]{0}', space=vmem, size = 0x12000, scoped, tag = 'input window, operand 4, single buffered']
    #allocation4 [shape = 's32[1]{0}', space=sflag, size = 0x4, scoped, tag = 'scoped memory for lenet_forward.1']
    #allocation5 [shape = 's32[1]{0}', space=sflag, size = 0x4, scoped, tag = 'scoped memory for lenet_forward.1']
    #allocation6 [shape = 'u8[184320]{0}', space=vmem, size = 0x2d000, scoped, tag = 'input window, operand 5, single buffered']
    #allocation7 [shape = 's32[1]{0}', space=sflag, size = 0x4, scoped, tag = 'scoped memory for lenet_forward.1']
    #allocation8 [shape = 'u8[131072]{0}', space=vmem, size = 0x20000, scoped, tag = 'input window, operand 9, single buffered']
    #allocation9 [shape = 'u8[45056]{0}', space=vmem, size = 0xb000, scoped, tag = 'input window, operand 13, single buffered']
    #allocation10 [shape = 's32[1]{0}', space=sflag, size = 0x4, scoped, tag = 'scoped memory for lenet_forward.1']
    #allocation11 [shape = 'u8[1024]{0}', space=vmem, size = 0x400, scoped, tag = 'output window, operand 0, single buffered']
    %20 = vsyncpa [#allocation4], 0
    %21 = vsyncpa [#allocation7], 0
    %22 = vsyncpa [#allocation10], 0
    %23 = vsyncpa [#allocation5], 0
    // Predicated region
    $region2: #{lenet_forward.1} parent=1 // pred_check
      _
    $region3: #{lenet_forward.1} parent=1 // pred_check_branch
      %25 = sbr.rel (0) target = $region5
    $region4: #{lenet_forward.1} parent=1 // pred_region
      _
    $region5: #{lenet_forward.1} parent=1 // pred_fallthru
      _
    // Predicated region
    $region6: #{lenet_forward.1} parent=1 // pred_check
      _
    $region7: #{lenet_forward.1} parent=1 // pred_check_branch
      %27 = sbr.rel (0) target = $region9
    $region8: #{lenet_forward.1} parent=1 // pred_region
      _
    $region9: #{lenet_forward.1} parent=1 // pred_fallthru
      _
    // Predicated region
    $region10: #{lenet_forward.1} parent=1 // pred_check
      _
    $region11: #{lenet_forward.1} parent=1 // pred_check_branch
      %29 = sbr.rel (0) target = $region13
    $region12: #{lenet_forward.1} parent=1 // pred_region
      _
    $region13: #{lenet_forward.1} parent=1 // pred_fallthru
      _
    // Predicated region
    $region14: #{lenet_forward.1} parent=1 // pred_check
      _
    $region15: #{lenet_forward.1} parent=1 // pred_check_branch
      %31 = sbr.rel (0) target = $region17
    $region16: #{lenet_forward.1} parent=1 // pred_region
      _
    $region17: #{lenet_forward.1} parent=1 // pred_fallthru
      _
    // Predicated region
    $region18: #{lenet_forward.1} parent=1 // pred_check
      _
    $region19: #{lenet_forward.1} parent=1 // pred_check_branch
      %33 = sbr.rel (0) target = $region21
    $region20: #{lenet_forward.1} parent=1 // pred_region
      %35 = vsyncadd [#allocation4], 0
      %s36 = sshll.u32 %s4, 4
      %s37 = int_to_ptr.hbm [resolvable:$true] %s36
      %s38 = sshll.u32 [#allocation3], 4
      %s39 = int_to_ptr.vmem [resolvable:$true] %s38
      %44 = dma.hbm_to_vmem [thread:$0]  %s37, 2304, %s39, [#allocation4], 128, 128, 8
    $region21: #{lenet_forward.1} parent=1 // pred_fallthru
      _
    // Predicated region
    $region22: #{lenet_forward.1} parent=1 // pred_check
      _
    $region23: #{lenet_forward.1} parent=1 // pred_check_branch
      %46 = sbr.rel (0) target = $region25
    $region24: #{lenet_forward.1} parent=1 // pred_region
      %48 = vsyncadd [#allocation7], 0
      %s49 = sshll.u32 %s5, 4
      %s50 = int_to_ptr.hbm [resolvable:$true] %s49
      %s51 = sshll.u32 [#allocation6], 4
      %s52 = int_to_ptr.vmem [resolvable:$true] %s51
      %57 = dma.hbm_to_vmem [thread:$0]  %s50, 5760, %s52, [#allocation7], 128, 128, 8
    $region25: #{lenet_forward.1} parent=1 // pred_fallthru
      _
    // Predicated region
    $region26: #{lenet_forward.1} parent=1 // pred_check
      _
    $region27: #{lenet_forward.1} parent=1 // pred_check_branch
      %59 = sbr.rel (0) target = $region29
    $region28: #{lenet_forward.1} parent=1 // pred_region
      _
    $region29: #{lenet_forward.1} parent=1 // pred_fallthru
      _
    // Predicated region
    $region30: #{lenet_forward.1} parent=1 // pred_check
      _
    $region31: #{lenet_forward.1} parent=1 // pred_check_branch
      %61 = sbr.rel (0) target = $region33
    $region32: #{lenet_forward.1} parent=1 // pred_region
      _
    $region33: #{lenet_forward.1} parent=1 // pred_fallthru
      _
    // Predicated region
    $region34: #{lenet_forward.1} parent=1 // pred_check
      _
    $region35: #{lenet_forward.1} parent=1 // pred_check_branch
      %63 = sbr.rel (0) target = $region37
    $region36: #{lenet_forward.1} parent=1 // pred_region
      _
    $region37: #{lenet_forward.1} parent=1 // pred_fallthru
      _
    // Predicated region
    $region38: #{lenet_forward.1} parent=1 // pred_check
      _
    $region39: #{lenet_forward.1} parent=1 // pred_check_branch
      %65 = sbr.rel (0) target = $region41
    $region40: #{lenet_forward.1} parent=1 // pred_region
      %67 = vsyncadd [#allocation7], 0
      %s68 = sshll.u32 %s9, 4
      %s69 = int_to_ptr.hbm [resolvable:$true] %s68
      %s70 = sshll.u32 [#allocation8], 4
      %s71 = int_to_ptr.vmem [resolvable:$true] %s70
      %76 = dma.hbm_to_vmem [thread:$0]  %s69, 4096, %s71, [#allocation7], 128, 128, 8
    $region41: #{lenet_forward.1} parent=1 // pred_fallthru
      _
    // Predicated region
    $region42: #{lenet_forward.1} parent=1 // pred_check
      _
    $region43: #{lenet_forward.1} parent=1 // pred_check_branch
      %78 = sbr.rel (0) target = $region45
    $region44: #{lenet_forward.1} parent=1 // pred_region
      _
    $region45: #{lenet_forward.1} parent=1 // pred_fallthru
      _
    // Predicated region
    $region46: #{lenet_forward.1} parent=1 // pred_check
      _
    $region47: #{lenet_forward.1} parent=1 // pred_check_branch
      %80 = sbr.rel (0) target = $region49
    $region48: #{lenet_forward.1} parent=1 // pred_region
      _
    $region49: #{lenet_forward.1} parent=1 // pred_fallthru
      _
    // Predicated region
    $region50: #{lenet_forward.1} parent=1 // pred_check
      _
    $region51: #{lenet_forward.1} parent=1 // pred_check_branch
      %82 = sbr.rel (0) target = $region53
    $region52: #{lenet_forward.1} parent=1 // pred_region
      _
    $region53: #{lenet_forward.1} parent=1 // pred_fallthru
      _
    // Predicated region
    $region54: #{lenet_forward.1} parent=1 // pred_check
      _
    $region55: #{lenet_forward.1} parent=1 // pred_check_branch
      %84 = sbr.rel (0) target = $region57
    $region56: #{lenet_forward.1} parent=1 // pred_region
      %86 = vsyncadd [#allocation10], 0
      %s87 = sshll.u32 %s13, 4
      %s88 = int_to_ptr.hbm [resolvable:$true] %s87
      %s89 = sshll.u32 [#allocation9], 4
      %s90 = int_to_ptr.vmem [resolvable:$true] %s89
      %95 = dma.hbm_to_vmem [thread:$0]  %s88, 1408, %s90, [#allocation10], 128, 128, 8
    $region57: #{lenet_forward.1} parent=1 // pred_fallthru
      _
    // Predicated region
    $region58: #{lenet_forward.1} parent=1 // pred_check
      _
    $region59: #{lenet_forward.1} parent=1 // pred_check_branch
      %97 = sbr.rel (0) target = $region61
    $region60: #{lenet_forward.1} parent=1 // pred_region
      _
    $region61: #{lenet_forward.1} parent=1 // pred_fallthru
      _
    // Predicated region
    $region62: #{lenet_forward.1} parent=1 // pred_check
      _
    $region63: #{lenet_forward.1} parent=1 // pred_check_branch
      %99 = sbr.rel (0) target = $region65
    $region64: #{lenet_forward.1} parent=1 // pred_region
      %101 = dma.done [#allocation4], 2304
    $region65: #{lenet_forward.1} parent=1 // pred_fallthru
      _
    // Predicated region
    $region66: #{lenet_forward.1} parent=1 // pred_check
      _
    $region67: #{lenet_forward.1} parent=1 // pred_check_branch
      %103 = sbr.rel (0) target = $region69
    $region68: #{lenet_forward.1} parent=1 // pred_region
      %105 = dma.done [#allocation7], 5760
    $region69: #{lenet_forward.1} parent=1 // pred_fallthru
      _
    // Predicated region
    $region70: #{lenet_forward.1} parent=1 // pred_check
      _
    $region71: #{lenet_forward.1} parent=1 // pred_check_branch
      %107 = sbr.rel (0) target = $region73
    $region72: #{lenet_forward.1} parent=1 // pred_region
      %109 = dma.done [#allocation7], 4096
    $region73: #{lenet_forward.1} parent=1 // pred_fallthru
      _
    // Predicated region
    $region74: #{lenet_forward.1} parent=1 // pred_check
      _
    $region75: #{lenet_forward.1} parent=1 // pred_check_branch
      %111 = sbr.rel (0) target = $region77
    $region76: #{lenet_forward.1} parent=1 // pred_region
      %113 = dma.done [#allocation10], 1408
    $region77: #{lenet_forward.1} parent=1 // pred_fallthru
      _
    %v114 = vld [vmem:[%s0] sm:$0xff]
    %v115 = vld [vmem:[%s0 + $0x8] sm:$0xff]
    %v116 = vld [vmem:[%s0 + $0x10] sm:$0xff]
    %v117 = vld [vmem:[%s0 + $0x18] sm:$0xf]
    %v118 = vld [vmem:[%s1] sm:$0xff]
    %v119 = vld [vmem:[%s1 + $0x8] sm:$0xff]
    %v120 = vld [vmem:[%s1 + $0x10] sm:$0xff]
    %v121 = vld [vmem:[%s1 + $0x18] sm:$0xff]
    %v122 = vld [vmem:[%s1 + $0x20] sm:$0xff]
    %v123 = vld [vmem:[%s1 + $0x28] sm:$0xff]
    %v124 = vld [vmem:[%s1 + $0x30] sm:$0xf]
    %v125 = vld [vmem:[%s1 + $0x38] sm:$0xf]
    %s126 = scalar_lea.vmem %s1, 64
    %v127 = vld [vmem:[%s126] sm:$0xff]
    %v128 = vld [vmem:[%s126 + $0x8] sm:$0xff]
    %v129 = vld [vmem:[%s126 + $0x10] sm:$0xff]
    %v130 = vld [vmem:[%s126 + $0x18] sm:$0xff]
    %v131 = vld [vmem:[%s126 + $0x20] sm:$0xff]
    %v132 = vld [vmem:[%s126 + $0x28] sm:$0xff]
    %v133 = vld [vmem:[%s126 + $0x30] sm:$0xf]
    %v134 = vld [vmem:[%s126 + $0x38] sm:$0xf]
    %vm139 = vcmask 1046528
    %v140 = vrot.slane %v114, 1
    %v141 = vrot.slane %v115, 1
    %v142 = vsel %vm139, %v140, %v141
    %v143 = vrot.slane %v116, 1
    %v144 = vsel %vm139, %v141, %v143
    %v145 = vrot.slane %v117, 1
    %v146 = vsel %vm139, %v143, %v145
    %vm147 = vcmask 228352
    %v148 = vsel %vm147, %v142, 0
    %v150 = vsel %vm147, %v144, 0
    %v152 = vsel %vm147, %v146, 0
    %vm154 = vcmask 1043456
    %v156 = vsel %vm154, %v133, 0
    %v159 = vsel %vm154, %v134, 0
    %161 = vmatpush.msra.mxu0 0.0
    %162 = vmatpush.msra.mxu0 0.0
    %163 = vmatpush.msra.mxu0 0.0
    %164 = vmatpush.msra.mxu0 0.0
    %165 = vmatpush.msra.mxu0 0.0
    %166 = vmatpush.msra.mxu0 0.0
    %167 = vmatpush.msra.mxu0 0.0
    %168 = vmatpush.msra.mxu0 0.0
    %169 = vmatpush.msra.mxu0 0.0
    %170 = vmatpush.msra.mxu0 0.0
    %171 = vmatpush.msra.mxu0 0.0
    %172 = vmatpush.msra.mxu0 0.0
    %173 = vmatpush.msra.mxu0 %v156
    %174 = vmatpush.msra.mxu0 %v131
    %175 = vmatpush.msra.mxu0 %v129
    %176 = vmatpush.msra.mxu0 %v127
    %177 = vmatmul.f32.gmra.mxu0 %v148
    %v178 = vpop.f32.mrf.mxu0
    %v179 = vadd.f32 0.0, %v178
    %180 = vmatmul.f32.gmra.mxu0 %v150
    %v181 = vpop.f32.mrf.mxu0
    %v182 = vadd.f32 0.0, %v181
    %183 = vmatmul.f32.gmra.mxu0 %v152
    %v184 = vpop.f32.mrf.mxu0
    %v185 = vadd.f32 0.0, %v184
    %186 = vdwg.mxu0
    %187 = vmatpush.msra.mxu0 0.0
    %188 = vmatpush.msra.mxu0 0.0
    %189 = vmatpush.msra.mxu0 0.0
    %190 = vmatpush.msra.mxu0 0.0
    %191 = vmatpush.msra.mxu0 0.0
    %192 = vmatpush.msra.mxu0 0.0
    %193 = vmatpush.msra.mxu0 0.0
    %194 = vmatpush.msra.mxu0 0.0
    %195 = vmatpush.msra.mxu0 0.0
    %196 = vmatpush.msra.mxu0 0.0
    %197 = vmatpush.msra.mxu0 0.0
    %198 = vmatpush.msra.mxu0 0.0
    %199 = vmatpush.msra.mxu0 %v159
    %200 = vmatpush.msra.mxu0 %v132
    %201 = vmatpush.msra.mxu0 %v130
    %202 = vmatpush.msra.mxu0 %v128
    %203 = vmatmul.f32.gmra.mxu0 %v148
    %v204 = vpop.f32.mrf.mxu0
    %v205 = vadd.f32 0.0, %v204
    %206 = vmatmul.f32.gmra.mxu0 %v150
    %v207 = vpop.f32.mrf.mxu0
    %v208 = vadd.f32 0.0, %v207
    %209 = vmatmul.f32.gmra.mxu0 %v152
    %v210 = vpop.f32.mrf.mxu0
    %v211 = vadd.f32 0.0, %v210
    %212 = vdwg.mxu0
    %v213 = vsel %vm147, %v114, 0
    %v215 = vsel %vm147, %v115, 0
    %v217 = vsel %vm147, %v116, 0
    %v220 = vsel %vm154, %v124, 0
    %v223 = vsel %vm154, %v125, 0
    %225 = vmatpush.msra.mxu0 0.0
    %226 = vmatpush.msra.mxu0 0.0
    %227 = vmatpush.msra.mxu0 0.0
    %228 = vmatpush.msra.mxu0 0.0
    %229 = vmatpush.msra.mxu0 0.0
    %230 = vmatpush.msra.mxu0 0.0
    %231 = vmatpush.msra.mxu0 0.0
    %232 = vmatpush.msra.mxu0 0.0
    %233 = vmatpush.msra.mxu0 0.0
    %234 = vmatpush.msra.mxu0 0.0
    %235 = vmatpush.msra.mxu0 0.0
    %236 = vmatpush.msra.mxu0 0.0
    %237 = vmatpush.msra.mxu0 %v220
    %238 = vmatpush.msra.mxu0 %v122
    %239 = vmatpush.msra.mxu0 %v120
    %240 = vmatpush.msra.mxu0 %v118
    %241 = vmatmul.f32.gmra.mxu0 %v213
    %v242 = vpop.f32.mrf.mxu0
    %v243 = vadd.f32 %v179, %v242
    %244 = vmatmul.f32.gmra.mxu0 %v215
    %v245 = vpop.f32.mrf.mxu0
    %v246 = vadd.f32 %v182, %v245
    %247 = vmatmul.f32.gmra.mxu0 %v217
    %v248 = vpop.f32.mrf.mxu0
    %v249 = vadd.f32 %v185, %v248
    %250 = vdwg.mxu0
    %251 = vmatpush.msra.mxu0 0.0
    %252 = vmatpush.msra.mxu0 0.0
    %253 = vmatpush.msra.mxu0 0.0
    %254 = vmatpush.msra.mxu0 0.0
    %255 = vmatpush.msra.mxu0 0.0
    %256 = vmatpush.msra.mxu0 0.0
    %257 = vmatpush.msra.mxu0 0.0
    %258 = vmatpush.msra.mxu0 0.0
    %259 = vmatpush.msra.mxu0 0.0
    %260 = vmatpush.msra.mxu0 0.0
    %261 = vmatpush.msra.mxu0 0.0
    %262 = vmatpush.msra.mxu0 0.0
    %263 = vmatpush.msra.mxu0 %v223
    %264 = vmatpush.msra.mxu0 %v123
    %265 = vmatpush.msra.mxu0 %v121
    %266 = vmatpush.msra.mxu0 %v119
    %267 = vmatmul.f32.gmra.mxu0 %v213
    %v268 = vpop.f32.mrf.mxu0
    %v269 = vadd.f32 %v205, %v268
    %270 = vmatmul.f32.gmra.mxu0 %v215
    %v271 = vpop.f32.mrf.mxu0
    %v272 = vadd.f32 %v208, %v271
    %273 = vmatmul.f32.gmra.mxu0 %v217
    %v274 = vpop.f32.mrf.mxu0
    %v275 = vadd.f32 %v211, %v274
    %276 = vdwg.mxu0
    %s277 = scalar_lea.vmem %s1, 128
    %v278 = vld [vmem:[%s277] sm:$0xff]
    %v279 = vld [vmem:[%s277 + $0x8] sm:$0xff]
    %v280 = vld [vmem:[%s277 + $0x10] sm:$0xff]
    %v281 = vld [vmem:[%s277 + $0x18] sm:$0xff]
    %v282 = vld [vmem:[%s277 + $0x20] sm:$0xff]
    %v283 = vld [vmem:[%s277 + $0x28] sm:$0xff]
    %v284 = vld [vmem:[%s277 + $0x30] sm:$0xf]
    %v285 = vld [vmem:[%s277 + $0x38] sm:$0xf]
    %vm286 = vcmask 1045504
    %v287 = vrot.slane %v114, 2
    %v288 = vrot.slane %v115, 2
    %v289 = vsel %vm286, %v287, %v288
    %v290 = vrot.slane %v116, 2
    %v291 = vsel %vm286, %v288, %v290
    %v292 = vrot.slane %v117, 2
    %v293 = vsel %vm286, %v290, %v292
    %v294 = vsel %vm147, %v289, 0
    %v296 = vsel %vm147, %v291, 0
    %v298 = vsel %vm147, %v293, 0
    %v301 = vsel %vm154, %v284, 0
    %v304 = vsel %vm154, %v285, 0
    %306 = vmatpush.msra.mxu0 0.0
    %307 = vmatpush.msra.mxu0 0.0
    %308 = vmatpush.msra.mxu0 0.0
    %309 = vmatpush.msra.mxu0 0.0
    %310 = vmatpush.msra.mxu0 0.0
    %311 = vmatpush.msra.mxu0 0.0
    %312 = vmatpush.msra.mxu0 0.0
    %313 = vmatpush.msra.mxu0 0.0
    %314 = vmatpush.msra.mxu0 0.0
    %315 = vmatpush.msra.mxu0 0.0
    %316 = vmatpush.msra.mxu0 0.0
    %317 = vmatpush.msra.mxu0 0.0
    %318 = vmatpush.msra.mxu0 %v301
    %319 = vmatpush.msra.mxu0 %v282
    %320 = vmatpush.msra.mxu0 %v280
    %321 = vmatpush.msra.mxu0 %v278
    %322 = vmatmul.f32.gmra.mxu0 %v294
    %v323 = vpop.f32.mrf.mxu0
    %v324 = vadd.f32 0.0, %v323
    %325 = vmatmul.f32.gmra.mxu0 %v296
    %v326 = vpop.f32.mrf.mxu0
    %v327 = vadd.f32 0.0, %v326
    %328 = vmatmul.f32.gmra.mxu0 %v298
    %v329 = vpop.f32.mrf.mxu0
    %v330 = vadd.f32 0.0, %v329
    %331 = vdwg.mxu0
    %332 = vmatpush.msra.mxu0 0.0
    %333 = vmatpush.msra.mxu0 0.0
    %334 = vmatpush.msra.mxu0 0.0
    %335 = vmatpush.msra.mxu0 0.0
    %336 = vmatpush.msra.mxu0 0.0
    %337 = vmatpush.msra.mxu0 0.0
    %338 = vmatpush.msra.mxu0 0.0
    %339 = vmatpush.msra.mxu0 0.0
    %340 = vmatpush.msra.mxu0 0.0
    %341 = vmatpush.msra.mxu0 0.0
    %342 = vmatpush.msra.mxu0 0.0
    %343 = vmatpush.msra.mxu0 0.0
    %344 = vmatpush.msra.mxu0 %v304
    %345 = vmatpush.msra.mxu0 %v283
    %346 = vmatpush.msra.mxu0 %v281
    %347 = vmatpush.msra.mxu0 %v279
    %348 = vmatmul.f32.gmra.mxu0 %v294
    %v349 = vpop.f32.mrf.mxu0
    %v350 = vadd.f32 0.0, %v349
    %351 = vmatmul.f32.gmra.mxu0 %v296
    %v352 = vpop.f32.mrf.mxu0
    %v353 = vadd.f32 0.0, %v352
    %354 = vmatmul.f32.gmra.mxu0 %v298
    %v355 = vpop.f32.mrf.mxu0
    %v356 = vadd.f32 0.0, %v355
    %357 = vdwg.mxu0
    %v358 = vadd.f32 %v243, %v324
    %v359 = vadd.f32 %v269, %v350
    %v360 = vadd.f32 %v246, %v327
    %v361 = vadd.f32 %v272, %v353
    %v362 = vadd.f32 %v249, %v330
    %v363 = vadd.f32 %v275, %v356
    %s364 = scalar_lea.vmem %s1, 192
    %v365 = vld [vmem:[%s364] sm:$0xff]
    %v366 = vld [vmem:[%s364 + $0x8] sm:$0xff]
    %v367 = vld [vmem:[%s364 + $0x10] sm:$0xff]
    %v368 = vld [vmem:[%s364 + $0x18] sm:$0xff]
    %v369 = vld [vmem:[%s364 + $0x20] sm:$0xff]
    %v370 = vld [vmem:[%s364 + $0x28] sm:$0xff]
    %v371 = vld [vmem:[%s364 + $0x30] sm:$0xf]
    %v372 = vld [vmem:[%s364 + $0x38] sm:$0xf]
    %vm373 = vcmask 1044480
    %v374 = vrot.slane %v114, 3
    %v375 = vrot.slane %v115, 3
    %v376 = vsel %vm373, %v374, %v375
    %v377 = vrot.slane %v116, 3
    %v378 = vsel %vm373, %v375, %v377
    %v379 = vrot.slane %v117, 3
    %v380 = vsel %vm373, %v377, %v379
    %v381 = vsel %vm147, %v376, 0
    %v383 = vsel %vm147, %v378, 0
    %v385 = vsel %vm147, %v380, 0
    %v388 = vsel %vm154, %v371, 0
    %v391 = vsel %vm154, %v372, 0
    %393 = vmatpush.msra.mxu0 0.0
    %394 = vmatpush.msra.mxu0 0.0
    %395 = vmatpush.msra.mxu0 0.0
    %396 = vmatpush.msra.mxu0 0.0
    %397 = vmatpush.msra.mxu0 0.0
    %398 = vmatpush.msra.mxu0 0.0
    %399 = vmatpush.msra.mxu0 0.0
    %400 = vmatpush.msra.mxu0 0.0
    %401 = vmatpush.msra.mxu0 0.0
    %402 = vmatpush.msra.mxu0 0.0
    %403 = vmatpush.msra.mxu0 0.0
    %404 = vmatpush.msra.mxu0 0.0
    %405 = vmatpush.msra.mxu0 %v388
    %406 = vmatpush.msra.mxu0 %v369
    %407 = vmatpush.msra.mxu0 %v367
    %408 = vmatpush.msra.mxu0 %v365
    %409 = vmatmul.f32.gmra.mxu0 %v381
    %v410 = vpop.f32.mrf.mxu0
    %v411 = vadd.f32 0.0, %v410
    %412 = vmatmul.f32.gmra.mxu0 %v383
    %v413 = vpop.f32.mrf.mxu0
    %v414 = vadd.f32 0.0, %v413
    %415 = vmatmul.f32.gmra.mxu0 %v385
    %v416 = vpop.f32.mrf.mxu0
    %v417 = vadd.f32 0.0, %v416
    %418 = vdwg.mxu0
    %419 = vmatpush.msra.mxu0 0.0
    %420 = vmatpush.msra.mxu0 0.0
    %421 = vmatpush.msra.mxu0 0.0
    %422 = vmatpush.msra.mxu0 0.0
    %423 = vmatpush.msra.mxu0 0.0
    %424 = vmatpush.msra.mxu0 0.0
    %425 = vmatpush.msra.mxu0 0.0
    %426 = vmatpush.msra.mxu0 0.0
    %427 = vmatpush.msra.mxu0 0.0
    %428 = vmatpush.msra.mxu0 0.0
    %429 = vmatpush.msra.mxu0 0.0
    %430 = vmatpush.msra.mxu0 0.0
    %431 = vmatpush.msra.mxu0 %v391
    %432 = vmatpush.msra.mxu0 %v370
    %433 = vmatpush.msra.mxu0 %v368
    %434 = vmatpush.msra.mxu0 %v366
    %435 = vmatmul.f32.gmra.mxu0 %v381
    %v436 = vpop.f32.mrf.mxu0
    %v437 = vadd.f32 0.0, %v436
    %438 = vmatmul.f32.gmra.mxu0 %v383
    %v439 = vpop.f32.mrf.mxu0
    %v440 = vadd.f32 0.0, %v439
    %441 = vmatmul.f32.gmra.mxu0 %v385
    %v442 = vpop.f32.mrf.mxu0
    %v443 = vadd.f32 0.0, %v442
    %444 = vdwg.mxu0
    %v445 = vadd.f32 %v358, %v411
    %v446 = vadd.f32 %v359, %v437
    %v447 = vadd.f32 %v360, %v414
    %v448 = vadd.f32 %v361, %v440
    %v449 = vadd.f32 %v362, %v417
    %v450 = vadd.f32 %v363, %v443
    %s451 = scalar_lea.vmem %s1, 256
    %v452 = vld [vmem:[%s451] sm:$0xff]
    %v453 = vld [vmem:[%s451 + $0x8] sm:$0xff]
    %v454 = vld [vmem:[%s451 + $0x10] sm:$0xff]
    %v455 = vld [vmem:[%s451 + $0x18] sm:$0xff]
    %v456 = vld [vmem:[%s451 + $0x20] sm:$0xff]
    %v457 = vld [vmem:[%s451 + $0x28] sm:$0xff]
    %v458 = vld [vmem:[%s451 + $0x30] sm:$0xf]
    %v459 = vld [vmem:[%s451 + $0x38] sm:$0xf]
    %v460 = vrot.slane %v114, 4
    %v461 = vrot.slane %v115, 4
    %v462 = vsel %vm154, %v460, %v461
    %v463 = vrot.slane %v116, 4
    %v464 = vsel %vm154, %v461, %v463
    %v465 = vrot.slane %v117, 4
    %v466 = vsel %vm154, %v463, %v465
    %v467 = vsel %vm147, %v462, 0
    %v469 = vsel %vm147, %v464, 0
    %v471 = vsel %vm147, %v466, 0
    %v474 = vsel %vm154, %v458, 0
    %v477 = vsel %vm154, %v459, 0
    %479 = vmatpush.msra.mxu0 0.0
    %480 = vmatpush.msra.mxu0 0.0
    %481 = vmatpush.msra.mxu0 0.0
    %482 = vmatpush.msra.mxu0 0.0
    %483 = vmatpush.msra.mxu0 0.0
    %484 = vmatpush.msra.mxu0 0.0
    %485 = vmatpush.msra.mxu0 0.0
    %486 = vmatpush.msra.mxu0 0.0
    %487 = vmatpush.msra.mxu0 0.0
    %488 = vmatpush.msra.mxu0 0.0
    %489 = vmatpush.msra.mxu0 0.0
    %490 = vmatpush.msra.mxu0 0.0
    %491 = vmatpush.msra.mxu0 %v474
    %492 = vmatpush.msra.mxu0 %v456
    %493 = vmatpush.msra.mxu0 %v454
    %494 = vmatpush.msra.mxu0 %v452
    %495 = vmatmul.f32.gmra.mxu0 %v467
    %v496 = vpop.f32.mrf.mxu0
    %v497 = vadd.f32 0.0, %v496
    %498 = vmatmul.f32.gmra.mxu0 %v469
    %v499 = vpop.f32.mrf.mxu0
    %v500 = vadd.f32 0.0, %v499
    %501 = vmatmul.f32.gmra.mxu0 %v471
    %v502 = vpop.f32.mrf.mxu0
    %v503 = vadd.f32 0.0, %v502
    %504 = vdwg.mxu0
    %505 = vmatpush.msra.mxu0 0.0
    %506 = vmatpush.msra.mxu0 0.0
    %507 = vmatpush.msra.mxu0 0.0
    %508 = vmatpush.msra.mxu0 0.0
    %509 = vmatpush.msra.mxu0 0.0
    %510 = vmatpush.msra.mxu0 0.0
    %511 = vmatpush.msra.mxu0 0.0
    %512 = vmatpush.msra.mxu0 0.0
    %513 = vmatpush.msra.mxu0 0.0
    %514 = vmatpush.msra.mxu0 0.0
    %515 = vmatpush.msra.mxu0 0.0
    %516 = vmatpush.msra.mxu0 0.0
    %517 = vmatpush.msra.mxu0 %v477
    %518 = vmatpush.msra.mxu0 %v457
    %519 = vmatpush.msra.mxu0 %v455
    %520 = vmatpush.msra.mxu0 %v453
    %521 = vmatmul.f32.gmra.mxu0 %v467
    %v522 = vpop.f32.mrf.mxu0
    %v523 = vadd.f32 0.0, %v522
    %524 = vmatmul.f32.gmra.mxu0 %v469
    %v525 = vpop.f32.mrf.mxu0
    %v526 = vadd.f32 0.0, %v525
    %527 = vmatmul.f32.gmra.mxu0 %v471
    %v528 = vpop.f32.mrf.mxu0
    %v529 = vadd.f32 0.0, %v528
    %530 = vdwg.mxu0
    %v531 = vadd.f32 %v445, %v497
    %v532 = vadd.f32 %v446, %v523
    %v533 = vadd.f32 %v447, %v500
    %v534 = vadd.f32 %v448, %v526
    %v535 = vadd.f32 %v449, %v503
    %v536 = vadd.f32 %v450, %v529
    %v537 = vld [vmem:[%s2] sm:$0x3]
    %v539 = vperm.slane %v537, 0
    %v540 = vperm.slane %v537, 1
    %v543 = vadd.f32 %v531, %v539
    %v544 = vadd.f32 %v532, %v540
    %v545 = vadd.f32 %v533, %v539
    %v546 = vadd.f32 %v534, %v540
    %v547 = vadd.f32 %v535, %v539
    %v548 = vadd.f32 %v536, %v540
    %v549 = vmax.f32 %v543, 0.0
    %v550 = vmax.f32 %v544, 0.0
    %v551 = vmax.f32 %v545, 0.0
    %v552 = vmax.f32 %v546, 0.0
    %v553 = vmax.f32 %v547, 0.0
    %v554 = vmax.f32 %v548, 0.0
    %561 = vrot.lane.b32.xlu0 %v549, 127
    %v562 = vpop.permute.xlu0 %561
    %563 = vrot.lane.b32.xlu0 %v550, 127
    %v564 = vpop.permute.xlu0 %563
    %565 = vrot.lane.b32.xlu0 %v551, 127
    %v566 = vpop.permute.xlu0 %565
    %567 = vrot.lane.b32.xlu0 %v552, 127
    %v568 = vpop.permute.xlu0 %567
    %569 = vrot.lane.b32.xlu0 %v553, 127
    %v570 = vpop.permute.xlu0 %569
    %571 = vrot.lane.b32.xlu0 %v554, 127
    %v572 = vpop.permute.xlu0 %571
    %vm573 = vcmask 1039360
    %v574 = vsel %vm573, %v562, %v564
    %v575 = vsel %vm573, %v566, %v568
    %v576 = vsel %vm573, %v570, %v572
    %v583 = vmax.f32 %v549, %v574
    %v584 = vmax.f32 %v550, %v564
    %v585 = vmax.f32 %v551, %v575
    %v586 = vmax.f32 %v552, %v568
    %v587 = vmax.f32 %v553, %v576
    %v588 = vmax.f32 %v554, %v572
    %v595 = vrot.slane %v583, 1
    %v596 = vrot.slane %v585, 1
    %v597 = vsel %vm139, %v595, %v596
    %v598 = vrot.slane %v584, 1
    %v599 = vrot.slane %v586, 1
    %v600 = vsel %vm139, %v598, %v599
    %v601 = vrot.slane %v587, 1
    %v602 = vsel %vm139, %v596, %v601
    %v603 = vrot.slane %v588, 1
    %v604 = vsel %vm139, %v599, %v603
    %v611 = vmax.f32 %v583, %v597
    %v612 = vmax.f32 %v584, %v600
    %v613 = vmax.f32 %v585, %v602
    %v614 = vmax.f32 %v586, %v604
    %v615 = vmax.f32 %v587, %v601
    %v616 = vmax.f32 %v588, %v603
    %v617 = vld [vmem:[%s3] sm:$0xff]
    %v618 = vld [vmem:[%s3 + $0x8] sm:$0xf]
    %v619 = vld [vmem:[#allocation3] sm:$0xff]
    %v620 = vld [vmem:[#allocation3 + $0x8] sm:$0xff]
    %v621 = vld [vmem:[#allocation3 + $0x10] sm:$0xff]
    %v622 = vld [vmem:[#allocation3 + $0x18] sm:$0xff]
    %v623 = vld [vmem:[#allocation3 + $0x20] sm:$0xff]
    %v624 = vld [vmem:[#allocation3 + $0x28] sm:$0xff]
    %v625 = vld [vmem:[#allocation3 + $0x30] sm:$0xff]
    %v626 = vld [vmem:[#allocation3 + $0x38] sm:$0xff]
    %v627 = vld [vmem:[#allocation3 + $0x40] sm:$0xff]
    %v628 = vld [vmem:[#allocation3 + $0x48] sm:$0xff]
    %v629 = vld [vmem:[#allocation3 + $0x50] sm:$0xff]
    %v630 = vld [vmem:[#allocation3 + $0x58] sm:$0xff]
    %v631 = vld [vmem:[#allocation3 + $0x60] sm:$0xff]
    %v632 = vld [vmem:[#allocation3 + $0x68] sm:$0xff]
    %v633 = vld [vmem:[#allocation3 + $0x70] sm:$0xff]
    %v634 = vld [vmem:[#allocation3 + $0x78] sm:$0xff]
    %v635 = vld [vmem:[#allocation3 + $0x80] sm:$0xff]
    %v636 = vld [vmem:[#allocation3 + $0x88] sm:$0x7f]
    %vm637 = vcmask 121856
    %v639 = vsel %vm637, %v612, 0
    %v642 = vsel %vm637, %v614, 0
    %v645 = vsel %vm637, %v616, 0
    %v648 = vsel %vm139, %v636, 0
    %650 = vmatpush.msra.mxu0 %v634
    %651 = vmatpush.msra.mxu0 %v633
    %652 = vmatpush.msra.mxu0 %v632
    %653 = vmatpush.msra.mxu0 %v631
    %654 = vmatpush.msra.mxu0 %v630
    %655 = vmatpush.msra.mxu0 %v629
    %656 = vmatpush.msra.mxu0 %v628
    %657 = vmatpush.msra.mxu0 %v627
    %658 = vmatpush.msra.mxu0 %v626
    %659 = vmatpush.msra.mxu0 %v625
    %660 = vmatpush.msra.mxu0 %v624
    %661 = vmatpush.msra.mxu0 %v623
    %662 = vmatpush.msra.mxu0 %v622
    %663 = vmatpush.msra.mxu0 %v621
    %664 = vmatpush.msra.mxu0 %v620
    %665 = vmatpush.msra.mxu0 %v619
    %666 = vmatmul.f32.gmra.mxu0 %v611
    %v667 = vpop.f32.mrf.mxu0
    %v668 = vadd.f32 0.0, %v667
    %669 = vmatmul.f32.gmra.mxu0 %v613
    %v670 = vpop.f32.mrf.mxu0
    %v671 = vadd.f32 0.0, %v670
    %672 = vmatmul.f32.gmra.mxu0 %v615
    %v673 = vpop.f32.mrf.mxu0
    %v674 = vadd.f32 0.0, %v673
    %675 = vdwg.mxu0
    %676 = vmatpush.msra.mxu0 0.0
    %677 = vmatpush.msra.mxu0 0.0
    %678 = vmatpush.msra.mxu0 0.0
    %679 = vmatpush.msra.mxu0 0.0
    %680 = vmatpush.msra.mxu0 0.0
    %681 = vmatpush.msra.mxu0 0.0
    %682 = vmatpush.msra.mxu0 0.0
    %683 = vmatpush.msra.mxu0 0.0
    %684 = vmatpush.msra.mxu0 0.0
    %685 = vmatpush.msra.mxu0 0.0
    %686 = vmatpush.msra.mxu0 0.0
    %687 = vmatpush.msra.mxu0 0.0
    %688 = vmatpush.msra.mxu0 0.0
    %689 = vmatpush.msra.mxu0 0.0
    %690 = vmatpush.msra.mxu0 %v648
    %691 = vmatpush.msra.mxu0 %v635
    %692 = vmatmul.f32.gmra.mxu0 %v639
    %v693 = vpop.f32.mrf.mxu0
    %v694 = vadd.f32 %v668, %v693
    %695 = vmatmul.f32.gmra.mxu0 %v642
    %v696 = vpop.f32.mrf.mxu0
    %v697 = vadd.f32 %v671, %v696
    %698 = vmatmul.f32.gmra.mxu0 %v645
    %v699 = vpop.f32.mrf.mxu0
    %v700 = vadd.f32 %v674, %v699
    %701 = vdwg.mxu0
    %vm702 = vcmask 187392
    %v704 = vsel %vm702, %v617, 0
    %v707 = vsel %vm702, %v618, 0
    %v710 = vsel %vm139, %v700, 0
    %712 = vmatpush.msra.mxu0 0.0
    %713 = vmatpush.msra.mxu0 0.0
    %714 = vmatpush.msra.mxu0 0.0
    %715 = vmatpush.msra.mxu0 0.0
    %716 = vmatpush.msra.mxu0 0.0
    %717 = vmatpush.msra.mxu0 0.0
    %718 = vmatpush.msra.mxu0 0.0
    %719 = vmatpush.msra.mxu0 0.0
    %720 = vmatpush.msra.mxu0 0.0
    %721 = vmatpush.msra.mxu0 0.0
    %722 = vmatpush.msra.mxu0 0.0
    %723 = vmatpush.msra.mxu0 0.0
    %724 = vmatpush.msra.mxu0 0.0
    %725 = vmatpush.msra.mxu0 %v710
    %726 = vmatpush.msra.mxu0 %v697
    %727 = vmatpush.msra.mxu0 %v694
    %728 = vmatmul.f32.gmra.mxu0 %v704
    %v729 = vpop.f32.mrf.mxu0
    %v730 = vadd.f32 0.0, %v729
    %731 = vmatmul.f32.gmra.mxu0 %v707
    %v732 = vpop.f32.mrf.mxu0
    %v733 = vadd.f32 0.0, %v732
    %734 = vdwg.mxu0
    %v735 = vld [vmem:[#allocation6] sm:$0xff]
    %v736 = vld [vmem:[#allocation6 + $0x8] sm:$0xff]
    %v737 = vld [vmem:[#allocation6 + $0x10] sm:$0xff]
    %v738 = vld [vmem:[#allocation6 + $0x18] sm:$0xff]
    %v739 = vld [vmem:[#allocation6 + $0x20] sm:$0xff]
    %v740 = vld [vmem:[#allocation6 + $0x28] sm:$0xff]
    %v741 = vld [vmem:[#allocation6 + $0x30] sm:$0xff]
    %v742 = vld [vmem:[#allocation6 + $0x38] sm:$0xff]
    %v743 = vld [vmem:[#allocation6 + $0x40] sm:$0xff]
    %s744 = scalar_lea.vmem [#allocation6], 72
    %v745 = vld [vmem:[%s744] sm:$0xff]
    %v746 = vld [vmem:[%s744 + $0x8] sm:$0xff]
    %v747 = vld [vmem:[%s744 + $0x10] sm:$0xff]
    %v748 = vld [vmem:[%s744 + $0x18] sm:$0xff]
    %v749 = vld [vmem:[%s744 + $0x20] sm:$0xff]
    %v750 = vld [vmem:[%s744 + $0x28] sm:$0xff]
    %v751 = vld [vmem:[%s744 + $0x30] sm:$0xff]
    %v752 = vld [vmem:[%s744 + $0x38] sm:$0xff]
    %v753 = vld [vmem:[%s744 + $0x40] sm:$0xff]
    %v756 = vrot.slane %v730, 1
    %v757 = vrot.slane %v733, 1
    %v758 = vsel %vm139, %v756, %v757
    %vm759 = vcmask 588800
    %v760 = vsel %vm759, %v758, 0
    %762 = vmatpush.msra.mxu0 0.0
    %763 = vmatpush.msra.mxu0 0.0
    %764 = vmatpush.msra.mxu0 0.0
    %765 = vmatpush.msra.mxu0 0.0
    %766 = vmatpush.msra.mxu0 0.0
    %767 = vmatpush.msra.mxu0 0.0
    %768 = vmatpush.msra.mxu0 0.0
    %769 = vmatpush.msra.mxu0 %v753
    %770 = vmatpush.msra.mxu0 %v752
    %771 = vmatpush.msra.mxu0 %v751
    %772 = vmatpush.msra.mxu0 %v750
    %773 = vmatpush.msra.mxu0 %v749
    %774 = vmatpush.msra.mxu0 %v748
    %775 = vmatpush.msra.mxu0 %v747
    %776 = vmatpush.msra.mxu0 %v746
    %777 = vmatpush.msra.mxu0 %v745
    %778 = vmatmul.f32.gmra.mxu0 %v760
    %v779 = vpop.f32.mrf.mxu0
    %v780 = vadd.f32 0.0, %v779
    %781 = vdwg.mxu0
    %v782 = vsel %vm759, %v730, 0
    %784 = vmatpush.msra.mxu0 0.0
    %785 = vmatpush.msra.mxu0 0.0
    %786 = vmatpush.msra.mxu0 0.0
    %787 = vmatpush.msra.mxu0 0.0
    %788 = vmatpush.msra.mxu0 0.0
    %789 = vmatpush.msra.mxu0 0.0
    %790 = vmatpush.msra.mxu0 0.0
    %791 = vmatpush.msra.mxu0 %v743
    %792 = vmatpush.msra.mxu0 %v742
    %793 = vmatpush.msra.mxu0 %v741
    %794 = vmatpush.msra.mxu0 %v740
    %795 = vmatpush.msra.mxu0 %v739
    %796 = vmatpush.msra.mxu0 %v738
    %797 = vmatpush.msra.mxu0 %v737
    %798 = vmatpush.msra.mxu0 %v736
    %799 = vmatpush.msra.mxu0 %v735
    %800 = vmatmul.f32.gmra.mxu0 %v782
    %v801 = vpop.f32.mrf.mxu0
    %v802 = vadd.f32 %v780, %v801
    %803 = vdwg.mxu0
    %s804 = scalar_lea.vmem [#allocation6], 144
    %v805 = vld [vmem:[%s804] sm:$0xff]
    %v806 = vld [vmem:[%s804 + $0x8] sm:$0xff]
    %v807 = vld [vmem:[%s804 + $0x10] sm:$0xff]
    %v808 = vld [vmem:[%s804 + $0x18] sm:$0xff]
    %v809 = vld [vmem:[%s804 + $0x20] sm:$0xff]
    %v810 = vld [vmem:[%s804 + $0x28] sm:$0xff]
    %v811 = vld [vmem:[%s804 + $0x30] sm:$0xff]
    %v812 = vld [vmem:[%s804 + $0x38] sm:$0xff]
    %v813 = vld [vmem:[%s804 + $0x40] sm:$0xff]
    %v814 = vrot.slane %v730, 2
    %v815 = vrot.slane %v733, 2
    %v816 = vsel %vm286, %v814, %v815
    %v817 = vsel %vm759, %v816, 0
    %819 = vmatpush.msra.mxu0 0.0
    %820 = vmatpush.msra.mxu0 0.0
    %821 = vmatpush.msra.mxu0 0.0
    %822 = vmatpush.msra.mxu0 0.0
    %823 = vmatpush.msra.mxu0 0.0
    %824 = vmatpush.msra.mxu0 0.0
    %825 = vmatpush.msra.mxu0 0.0
    %826 = vmatpush.msra.mxu0 %v813
    %827 = vmatpush.msra.mxu0 %v812
    %828 = vmatpush.msra.mxu0 %v811
    %829 = vmatpush.msra.mxu0 %v810
    %830 = vmatpush.msra.mxu0 %v809
    %831 = vmatpush.msra.mxu0 %v808
    %832 = vmatpush.msra.mxu0 %v807
    %833 = vmatpush.msra.mxu0 %v806
    %834 = vmatpush.msra.mxu0 %v805
    %835 = vmatmul.f32.gmra.mxu0 %v817
    %v836 = vpop.f32.mrf.mxu0
    %v837 = vadd.f32 0.0, %v836
    %838 = vdwg.mxu0
    %v839 = vadd.f32 %v802, %v837
    %s840 = scalar_lea.vmem [#allocation6], 216
    %v841 = vld [vmem:[%s840] sm:$0xff]
    %v842 = vld [vmem:[%s840 + $0x8] sm:$0xff]
    %v843 = vld [vmem:[%s840 + $0x10] sm:$0xff]
    %v844 = vld [vmem:[%s840 + $0x18] sm:$0xff]
    %v845 = vld [vmem:[%s840 + $0x20] sm:$0xff]
    %v846 = vld [vmem:[%s840 + $0x28] sm:$0xff]
    %v847 = vld [vmem:[%s840 + $0x30] sm:$0xff]
    %v848 = vld [vmem:[%s840 + $0x38] sm:$0xff]
    %v849 = vld [vmem:[%s840 + $0x40] sm:$0xff]
    %v850 = vrot.slane %v730, 3
    %v851 = vrot.slane %v733, 3
    %v852 = vsel %vm373, %v850, %v851
    %v853 = vsel %vm759, %v852, 0
    %855 = vmatpush.msra.mxu0 0.0
    %856 = vmatpush.msra.mxu0 0.0
    %857 = vmatpush.msra.mxu0 0.0
    %858 = vmatpush.msra.mxu0 0.0
    %859 = vmatpush.msra.mxu0 0.0
    %860 = vmatpush.msra.mxu0 0.0
    %861 = vmatpush.msra.mxu0 0.0
    %862 = vmatpush.msra.mxu0 %v849
    %863 = vmatpush.msra.mxu0 %v848
    %864 = vmatpush.msra.mxu0 %v847
    %865 = vmatpush.msra.mxu0 %v846
    %866 = vmatpush.msra.mxu0 %v845
    %867 = vmatpush.msra.mxu0 %v844
    %868 = vmatpush.msra.mxu0 %v843
    %869 = vmatpush.msra.mxu0 %v842
    %870 = vmatpush.msra.mxu0 %v841
    %871 = vmatmul.f32.gmra.mxu0 %v853
    %v872 = vpop.f32.mrf.mxu0
    %v873 = vadd.f32 0.0, %v872
    %874 = vdwg.mxu0
    %v875 = vadd.f32 %v839, %v873
    %s876 = scalar_lea.vmem [#allocation6], 288
    %v877 = vld [vmem:[%s876] sm:$0xff]
    %v878 = vld [vmem:[%s876 + $0x8] sm:$0xff]
    %v879 = vld [vmem:[%s876 + $0x10] sm:$0xff]
    %v880 = vld [vmem:[%s876 + $0x18] sm:$0xff]
    %v881 = vld [vmem:[%s876 + $0x20] sm:$0xff]
    %v882 = vld [vmem:[%s876 + $0x28] sm:$0xff]
    %v883 = vld [vmem:[%s876 + $0x30] sm:$0xff]
    %v884 = vld [vmem:[%s876 + $0x38] sm:$0xff]
    %v885 = vld [vmem:[%s876 + $0x40] sm:$0xff]
    %v886 = vrot.slane %v730, 4
    %v887 = vrot.slane %v733, 4
    %v888 = vsel %vm154, %v886, %v887
    %v889 = vsel %vm759, %v888, 0
    %891 = vmatpush.msra.mxu0 0.0
    %892 = vmatpush.msra.mxu0 0.0
    %893 = vmatpush.msra.mxu0 0.0
    %894 = vmatpush.msra.mxu0 0.0
    %895 = vmatpush.msra.mxu0 0.0
    %896 = vmatpush.msra.mxu0 0.0
    %897 = vmatpush.msra.mxu0 0.0
    %898 = vmatpush.msra.mxu0 %v885
    %899 = vmatpush.msra.mxu0 %v884
    %900 = vmatpush.msra.mxu0 %v883
    %901 = vmatpush.msra.mxu0 %v882
    %902 = vmatpush.msra.mxu0 %v881
    %903 = vmatpush.msra.mxu0 %v880
    %904 = vmatpush.msra.mxu0 %v879
    %905 = vmatpush.msra.mxu0 %v878
    %906 = vmatpush.msra.mxu0 %v877
    %907 = vmatmul.f32.gmra.mxu0 %v889
    %v908 = vpop.f32.mrf.mxu0
    %v909 = vadd.f32 0.0, %v908
    %910 = vdwg.mxu0
    %v911 = vadd.f32 %v875, %v909
    %v912 = vld [vmem:[%s6] sm:$0x1]
    %v914 = vperm.slane %v912, 0
    %v916 = vadd.f32 %v911, %v914
    %v917 = vmax.f32 %v916, 0.0
    %919 = vrot.lane.b32.xlu0 %v917, 127
    %v920 = vpop.permute.xlu0 %919
    %v922 = vmax.f32 %v917, %v920
    %v924 = vrot.slane %v922, 1
    %v926 = vmax.f32 %v922, %v924
    %v927 = vld [vmem:[%s7] sm:$0xf]
    %v928 = vld [vmem:[%s8] sm:$0xff]
    %v929 = vld [vmem:[%s8 + $0x8] sm:$0xff]
    %v930 = vld [vmem:[%s8 + $0x10] sm:$0xff]
    %v931 = vld [vmem:[%s8 + $0x18] sm:$0xff]
    %v932 = vld [vmem:[%s8 + $0x20] sm:$0xff]
    %v933 = vld [vmem:[%s8 + $0x28] sm:$0xff]
    %v934 = vld [vmem:[%s8 + $0x30] sm:$0xff]
    %v935 = vld [vmem:[%s8 + $0x38] sm:$0xff]
    %v936 = vld [vmem:[%s8 + $0x40] sm:$0xff]
    %v937 = vld [vmem:[%s8 + $0x48] sm:$0xff]
    %v938 = vld [vmem:[%s8 + $0x50] sm:$0xff]
    %v939 = vld [vmem:[%s8 + $0x58] sm:$0xff]
    %v940 = vld [vmem:[%s8 + $0x60] sm:$0xff]
    %v941 = vld [vmem:[%s8 + $0x68] sm:$0xff]
    %v942 = vld [vmem:[%s8 + $0x70] sm:$0xff]
    %v943 = vld [vmem:[%s8 + $0x78] sm:$0x7f]
    %v945 = vsel %vm573, %v926, 0
    %v948 = vsel %vm139, %v943, 0
    %950 = vmatpush.msra.mxu0 %v948
    %951 = vmatpush.msra.mxu0 %v942
    %952 = vmatpush.msra.mxu0 %v941
    %953 = vmatpush.msra.mxu0 %v940
    %954 = vmatpush.msra.mxu0 %v939
    %955 = vmatpush.msra.mxu0 %v938
    %956 = vmatpush.msra.mxu0 %v937
    %957 = vmatpush.msra.mxu0 %v936
    %958 = vmatpush.msra.mxu0 %v935
    %959 = vmatpush.msra.mxu0 %v934
    %960 = vmatpush.msra.mxu0 %v933
    %961 = vmatpush.msra.mxu0 %v932
    %962 = vmatpush.msra.mxu0 %v931
    %963 = vmatpush.msra.mxu0 %v930
    %964 = vmatpush.msra.mxu0 %v929
    %965 = vmatpush.msra.mxu0 %v928
    %966 = vmatmul.f32.gmra.mxu0 %v945
    %v967 = vpop.f32.mrf.mxu0
    %v968 = vadd.f32 0.0, %v967
    %969 = vdwg.mxu0
    %vm970 = vcmask 56320
    %v972 = vsel %vm970, %v927, 0
    %v975 = vsel %vm139, %v968, 0
    %977 = vmatpush.msra.mxu0 0.0
    %978 = vmatpush.msra.mxu0 0.0
    %979 = vmatpush.msra.mxu0 0.0
    %980 = vmatpush.msra.mxu0 0.0
    %981 = vmatpush.msra.mxu0 0.0
    %982 = vmatpush.msra.mxu0 0.0
    %983 = vmatpush.msra.mxu0 0.0
    %984 = vmatpush.msra.mxu0 0.0
    %985 = vmatpush.msra.mxu0 0.0
    %986 = vmatpush.msra.mxu0 0.0
    %987 = vmatpush.msra.mxu0 0.0
    %988 = vmatpush.msra.mxu0 0.0
    %989 = vmatpush.msra.mxu0 0.0
    %990 = vmatpush.msra.mxu0 0.0
    %991 = vmatpush.msra.mxu0 0.0
    %992 = vmatpush.msra.mxu0 %v975
    %993 = vmatmul.f32.gmra.mxu0 %v972
    %v994 = vpop.f32.mrf.mxu0
    %v995 = vadd.f32 0.0, %v994
    %996 = vdwg.mxu0
    %vm997 = vcmask 516096
    %998 = vst.msk [vmem:[#allocation2] sm:$0x1] %vm997, %v995
    %vm999 = vcmask 517121
    %1000 = vst.msk [vmem:[#allocation2 + $0x1] sm:$0x2] %vm999, %v995
    %vm1001 = vcmask 518146
    %1002 = vst.msk [vmem:[#allocation2 + $0x2] sm:$0x4] %vm1001, %v995
    %vm1003 = vcmask 519171
    %1004 = vst.msk [vmem:[#allocation2 + $0x3] sm:$0x8] %vm1003, %v995
    %s1005 = scalar_lea.vmem %s0, 32
    %v1006 = vld [vmem:[%s1005] sm:$0xff]
    %v1007 = vld [vmem:[%s1005 + $0x8] sm:$0xff]
    %v1008 = vld [vmem:[%s1005 + $0x10] sm:$0xff]
    %v1009 = vld [vmem:[%s1005 + $0x18] sm:$0xf]
    %v1010 = vld [vmem:[%s1] sm:$0xff]
    %v1011 = vld [vmem:[%s1 + $0x8] sm:$0xff]
    %v1012 = vld [vmem:[%s1 + $0x10] sm:$0xff]
    %v1013 = vld [vmem:[%s1 + $0x18] sm:$0xff]
    %v1014 = vld [vmem:[%s1 + $0x20] sm:$0xff]
    %v1015 = vld [vmem:[%s1 + $0x28] sm:$0xff]
    %v1016 = vld [vmem:[%s1 + $0x30] sm:$0xf]
    %v1017 = vld [vmem:[%s1 + $0x38] sm:$0xf]
    %v1018 = vld [vmem:[%s126] sm:$0xff]
    %v1019 = vld [vmem:[%s126 + $0x8] sm:$0xff]
    %v1020 = vld [vmem:[%s126 + $0x10] sm:$0xff]
    %v1021 = vld [vmem:[%s126 + $0x18] sm:$0xff]
    %v1022 = vld [vmem:[%s126 + $0x20] sm:$0xff]
    %v1023 = vld [vmem:[%s126 + $0x28] sm:$0xff]
    %v1024 = vld [vmem:[%s126 + $0x30] sm:$0xf]
    %v1025 = vld [vmem:[%s126 + $0x38] sm:$0xf]
    %v1030 = vrot.slane %v1006, 1
    %v1031 = vrot.slane %v1007, 1
    %v1032 = vsel %vm139, %v1030, %v1031
    %v1033 = vrot.slane %v1008, 1
    %v1034 = vsel %vm139, %v1031, %v1033
    %v1035 = vrot.slane %v1009, 1
    %v1036 = vsel %vm139, %v1033, %v1035
    %v1037 = vsel %vm147, %v1032, 0
    %v1039 = vsel %vm147, %v1034, 0
    %v1041 = vsel %vm147, %v1036, 0
    %v1044 = vsel %vm154, %v1024, 0
    %v1047 = vsel %vm154, %v1025, 0
    %1049 = vmatpush.msra.mxu0 0.0
    %1050 = vmatpush.msra.mxu0 0.0
    %1051 = vmatpush.msra.mxu0 0.0
    %1052 = vmatpush.msra.mxu0 0.0
    %1053 = vmatpush.msra.mxu0 0.0
    %1054 = vmatpush.msra.mxu0 0.0
    %1055 = vmatpush.msra.mxu0 0.0
    %1056 = vmatpush.msra.mxu0 0.0
    %1057 = vmatpush.msra.mxu0 0.0
    %1058 = vmatpush.msra.mxu0 0.0
    %1059 = vmatpush.msra.mxu0 0.0
    %1060 = vmatpush.msra.mxu0 0.0
    %1061 = vmatpush.msra.mxu0 %v1044
    %1062 = vmatpush.msra.mxu0 %v1022
    %1063 = vmatpush.msra.mxu0 %v1020
    %1064 = vmatpush.msra.mxu0 %v1018
    %1065 = vmatmul.f32.gmra.mxu0 %v1037
    %v1066 = vpop.f32.mrf.mxu0
    %v1067 = vadd.f32 0.0, %v1066
    %1068 = vmatmul.f32.gmra.mxu0 %v1039
    %v1069 = vpop.f32.mrf.mxu0
    %v1070 = vadd.f32 0.0, %v1069
    %1071 = vmatmul.f32.gmra.mxu0 %v1041
    %v1072 = vpop.f32.mrf.mxu0
    %v1073 = vadd.f32 0.0, %v1072
    %1074 = vdwg.mxu0
    %1075 = vmatpush.msra.mxu0 0.0
    %1076 = vmatpush.msra.mxu0 0.0
    %1077 = vmatpush.msra.mxu0 0.0
    %1078 = vmatpush.msra.mxu0 0.0
    %1079 = vmatpush.msra.mxu0 0.0
    %1080 = vmatpush.msra.mxu0 0.0
    %1081 = vmatpush.msra.mxu0 0.0
    %1082 = vmatpush.msra.mxu0 0.0
    %1083 = vmatpush.msra.mxu0 0.0
    %1084 = vmatpush.msra.mxu0 0.0
    %1085 = vmatpush.msra.mxu0 0.0
    %1086 = vmatpush.msra.mxu0 0.0
    %1087 = vmatpush.msra.mxu0 %v1047
    %1088 = vmatpush.msra.mxu0 %v1023
    %1089 = vmatpush.msra.mxu0 %v1021
    %1090 = vmatpush.msra.mxu0 %v1019
    %1091 = vmatmul.f32.gmra.mxu0 %v1037
    %v1092 = vpop.f32.mrf.mxu0
    %v1093 = vadd.f32 0.0, %v1092
    %1094 = vmatmul.f32.gmra.mxu0 %v1039
    %v1095 = vpop.f32.mrf.mxu0
    %v1096 = vadd.f32 0.0, %v1095
    %1097 = vmatmul.f32.gmra.mxu0 %v1041
    %v1098 = vpop.f32.mrf.mxu0
    %v1099 = vadd.f32 0.0, %v1098
    %1100 = vdwg.mxu0
    %v1101 = vsel %vm147, %v1006, 0
    %v1103 = vsel %vm147, %v1007, 0
    %v1105 = vsel %vm147, %v1008, 0
    %v1108 = vsel %vm154, %v1016, 0
    %v1111 = vsel %vm154, %v1017, 0
    %1113 = vmatpush.msra.mxu0 0.0
    %1114 = vmatpush.msra.mxu0 0.0
    %1115 = vmatpush.msra.mxu0 0.0
    %1116 = vmatpush.msra.mxu0 0.0
    %1117 = vmatpush.msra.mxu0 0.0
    %1118 = vmatpush.msra.mxu0 0.0
    %1119 = vmatpush.msra.mxu0 0.0
    %1120 = vmatpush.msra.mxu0 0.0
    %1121 = vmatpush.msra.mxu0 0.0
    %1122 = vmatpush.msra.mxu0 0.0
    %1123 = vmatpush.msra.mxu0 0.0
    %1124 = vmatpush.msra.mxu0 0.0
    %1125 = vmatpush.msra.mxu0 %v1108
    %1126 = vmatpush.msra.mxu0 %v1014
    %1127 = vmatpush.msra.mxu0 %v1012
    %1128 = vmatpush.msra.mxu0 %v1010
    %1129 = vmatmul.f32.gmra.mxu0 %v1101
    %v1130 = vpop.f32.mrf.mxu0
    %v1131 = vadd.f32 %v1067, %v1130
    %1132 = vmatmul.f32.gmra.mxu0 %v1103
    %v1133 = vpop.f32.mrf.mxu0
    %v1134 = vadd.f32 %v1070, %v1133
    %1135 = vmatmul.f32.gmra.mxu0 %v1105
    %v1136 = vpop.f32.mrf.mxu0
    %v1137 = vadd.f32 %v1073, %v1136
    %1138 = vdwg.mxu0
    %1139 = vmatpush.msra.mxu0 0.0
    %1140 = vmatpush.msra.mxu0 0.0
    %1141 = vmatpush.msra.mxu0 0.0
    %1142 = vmatpush.msra.mxu0 0.0
    %1143 = vmatpush.msra.mxu0 0.0
    %1144 = vmatpush.msra.mxu0 0.0
    %1145 = vmatpush.msra.mxu0 0.0
    %1146 = vmatpush.msra.mxu0 0.0
    %1147 = vmatpush.msra.mxu0 0.0
    %1148 = vmatpush.msra.mxu0 0.0
    %1149 = vmatpush.msra.mxu0 0.0
    %1150 = vmatpush.msra.mxu0 0.0
    %1151 = vmatpush.msra.mxu0 %v1111
    %1152 = vmatpush.msra.mxu0 %v1015
    %1153 = vmatpush.msra.mxu0 %v1013
    %1154 = vmatpush.msra.mxu0 %v1011
    %1155 = vmatmul.f32.gmra.mxu0 %v1101
    %v1156 = vpop.f32.mrf.mxu0
    %v1157 = vadd.f32 %v1093, %v1156
    %1158 = vmatmul.f32.gmra.mxu0 %v1103
    %v1159 = vpop.f32.mrf.mxu0
    %v1160 = vadd.f32 %v1096, %v1159
    %1161 = vmatmul.f32.gmra.mxu0 %v1105
    %v1162 = vpop.f32.mrf.mxu0
    %v1163 = vadd.f32 %v1099, %v1162
    %1164 = vdwg.mxu0
    %v1165 = vld [vmem:[%s277] sm:$0xff]
    %v1166 = vld [vmem:[%s277 + $0x8] sm:$0xff]
    %v1167 = vld [vmem:[%s277 + $0x10] sm:$0xff]
    %v1168 = vld [vmem:[%s277 + $0x18] sm:$0xff]
    %v1169 = vld [vmem:[%s277 + $0x20] sm:$0xff]
    %v1170 = vld [vmem:[%s277 + $0x28] sm:$0xff]
    %v1171 = vld [vmem:[%s277 + $0x30] sm:$0xf]
    %v1172 = vld [vmem:[%s277 + $0x38] sm:$0xf]
    %v1173 = vrot.slane %v1006, 2
    %v1174 = vrot.slane %v1007, 2
    %v1175 = vsel %vm286, %v1173, %v1174
    %v1176 = vrot.slane %v1008, 2
    %v1177 = vsel %vm286, %v1174, %v1176
    %v1178 = vrot.slane %v1009, 2
    %v1179 = vsel %vm286, %v1176, %v1178
    %v1180 = vsel %vm147, %v1175, 0
    %v1182 = vsel %vm147, %v1177, 0
    %v1184 = vsel %vm147, %v1179, 0
    %v1187 = vsel %vm154, %v1171, 0
    %v1190 = vsel %vm154, %v1172, 0
    %1192 = vmatpush.msra.mxu0 0.0
    %1193 = vmatpush.msra.mxu0 0.0
    %1194 = vmatpush.msra.mxu0 0.0
    %1195 = vmatpush.msra.mxu0 0.0
    %1196 = vmatpush.msra.mxu0 0.0
    %1197 = vmatpush.msra.mxu0 0.0
    %1198 = vmatpush.msra.mxu0 0.0
    %1199 = vmatpush.msra.mxu0 0.0
    %1200 = vmatpush.msra.mxu0 0.0
    %1201 = vmatpush.msra.mxu0 0.0
    %1202 = vmatpush.msra.mxu0 0.0
    %1203 = vmatpush.msra.mxu0 0.0
    %1204 = vmatpush.msra.mxu0 %v1187
    %1205 = vmatpush.msra.mxu0 %v1169
    %1206 = vmatpush.msra.mxu0 %v1167
    %1207 = vmatpush.msra.mxu0 %v1165
    %1208 = vmatmul.f32.gmra.mxu0 %v1180
    %v1209 = vpop.f32.mrf.mxu0
    %v1210 = vadd.f32 0.0, %v1209
    %1211 = vmatmul.f32.gmra.mxu0 %v1182
    %v1212 = vpop.f32.mrf.mxu0
    %v1213 = vadd.f32 0.0, %v1212
    %1214 = vmatmul.f32.gmra.mxu0 %v1184
    %v1215 = vpop.f32.mrf.mxu0
    %v1216 = vadd.f32 0.0, %v1215
    %1217 = vdwg.mxu0
    %1218 = vmatpush.msra.mxu0 0.0
    %1219 = vmatpush.msra.mxu0 0.0
    %1220 = vmatpush.msra.mxu0 0.0
    %1221 = vmatpush.msra.mxu0 0.0
    %1222 = vmatpush.msra.mxu0 0.0
    %1223 = vmatpush.msra.mxu0 0.0
    %1224 = vmatpush.msra.mxu0 0.0
    %1225 = vmatpush.msra.mxu0 0.0
    %1226 = vmatpush.msra.mxu0 0.0
    %1227 = vmatpush.msra.mxu0 0.0
    %1228 = vmatpush.msra.mxu0 0.0
    %1229 = vmatpush.msra.mxu0 0.0
    %1230 = vmatpush.msra.mxu0 %v1190
    %1231 = vmatpush.msra.mxu0 %v1170
    %1232 = vmatpush.msra.mxu0 %v1168
    %1233 = vmatpush.msra.mxu0 %v1166
    %1234 = vmatmul.f32.gmra.mxu0 %v1180
    %v1235 = vpop.f32.mrf.mxu0
    %v1236 = vadd.f32 0.0, %v1235
    %1237 = vmatmul.f32.gmra.mxu0 %v1182
    %v1238 = vpop.f32.mrf.mxu0
    %v1239 = vadd.f32 0.0, %v1238
    %1240 = vmatmul.f32.gmra.mxu0 %v1184
    %v1241 = vpop.f32.mrf.mxu0
    %v1242 = vadd.f32 0.0, %v1241
    %1243 = vdwg.mxu0
    %v1244 = vadd.f32 %v1131, %v1210
    %v1245 = vadd.f32 %v1157, %v1236
    %v1246 = vadd.f32 %v1134, %v1213
    %v1247 = vadd.f32 %v1160, %v1239
    %v1248 = vadd.f32 %v1137, %v1216
    %v1249 = vadd.f32 %v1163, %v1242
    %v1250 = vld [vmem:[%s364] sm:$0xff]
    %v1251 = vld [vmem:[%s364 + $0x8] sm:$0xff]
    %v1252 = vld [vmem:[%s364 + $0x10] sm:$0xff]
    %v1253 = vld [vmem:[%s364 + $0x18] sm:$0xff]
    %v1254 = vld [vmem:[%s364 + $0x20] sm:$0xff]
    %v1255 = vld [vmem:[%s364 + $0x28] sm:$0xff]
    %v1256 = vld [vmem:[%s364 + $0x30] sm:$0xf]
    %v1257 = vld [vmem:[%s364 + $0x38] sm:$0xf]
    %v1258 = vrot.slane %v1006, 3
    %v1259 = vrot.slane %v1007, 3
    %v1260 = vsel %vm373, %v1258, %v1259
    %v1261 = vrot.slane %v1008, 3
    %v1262 = vsel %vm373, %v1259, %v1261
    %v1263 = vrot.slane %v1009, 3
    %v1264 = vsel %vm373, %v1261, %v1263
    %v1265 = vsel %vm147, %v1260, 0
    %v1267 = vsel %vm147, %v1262, 0
    %v1269 = vsel %vm147, %v1264, 0
    %v1272 = vsel %vm154, %v1256, 0
    %v1275 = vsel %vm154, %v1257, 0
    %1277 = vmatpush.msra.mxu0 0.0
    %1278 = vmatpush.msra.mxu0 0.0
    %1279 = vmatpush.msra.mxu0 0.0
    %1280 = vmatpush.msra.mxu0 0.0
    %1281 = vmatpush.msra.mxu0 0.0
    %1282 = vmatpush.msra.mxu0 0.0
    %1283 = vmatpush.msra.mxu0 0.0
    %1284 = vmatpush.msra.mxu0 0.0
    %1285 = vmatpush.msra.mxu0 0.0
    %1286 = vmatpush.msra.mxu0 0.0
    %1287 = vmatpush.msra.mxu0 0.0
    %1288 = vmatpush.msra.mxu0 0.0
    %1289 = vmatpush.msra.mxu0 %v1272
    %1290 = vmatpush.msra.mxu0 %v1254
    %1291 = vmatpush.msra.mxu0 %v1252
    %1292 = vmatpush.msra.mxu0 %v1250
    %1293 = vmatmul.f32.gmra.mxu0 %v1265
    %v1294 = vpop.f32.mrf.mxu0
    %v1295 = vadd.f32 0.0, %v1294
    %1296 = vmatmul.f32.gmra.mxu0 %v1267
    %v1297 = vpop.f32.mrf.mxu0
    %v1298 = vadd.f32 0.0, %v1297
    %1299 = vmatmul.f32.gmra.mxu0 %v1269
    %v1300 = vpop.f32.mrf.mxu0
    %v1301 = vadd.f32 0.0, %v1300
    %1302 = vdwg.mxu0
    %1303 = vmatpush.msra.mxu0 0.0
    %1304 = vmatpush.msra.mxu0 0.0
    %1305 = vmatpush.msra.mxu0 0.0
    %1306 = vmatpush.msra.mxu0 0.0
    %1307 = vmatpush.msra.mxu0 0.0
    %1308 = vmatpush.msra.mxu0 0.0
    %1309 = vmatpush.msra.mxu0 0.0
    %1310 = vmatpush.msra.mxu0 0.0
    %1311 = vmatpush.msra.mxu0 0.0
    %1312 = vmatpush.msra.mxu0 0.0
    %1313 = vmatpush.msra.mxu0 0.0
    %1314 = vmatpush.msra.mxu0 0.0
    %1315 = vmatpush.msra.mxu0 %v1275
    %1316 = vmatpush.msra.mxu0 %v1255
    %1317 = vmatpush.msra.mxu0 %v1253
    %1318 = vmatpush.msra.mxu0 %v1251
    %1319 = vmatmul.f32.gmra.mxu0 %v1265
    %v1320 = vpop.f32.mrf.mxu0
    %v1321 = vadd.f32 0.0, %v1320
    %1322 = vmatmul.f32.gmra.mxu0 %v1267
    %v1323 = vpop.f32.mrf.mxu0
    %v1324 = vadd.f32 0.0, %v1323
    %1325 = vmatmul.f32.gmra.mxu0 %v1269
    %v1326 = vpop.f32.mrf.mxu0
    %v1327 = vadd.f32 0.0, %v1326
    %1328 = vdwg.mxu0
    %v1329 = vadd.f32 %v1244, %v1295
    %v1330 = vadd.f32 %v1245, %v1321
    %v1331 = vadd.f32 %v1246, %v1298
    %v1332 = vadd.f32 %v1247, %v1324
    %v1333 = vadd.f32 %v1248, %v1301
    %v1334 = vadd.f32 %v1249, %v1327
    %v1335 = vld [vmem:[%s451] sm:$0xff]
    %v1336 = vld [vmem:[%s451 + $0x8] sm:$0xff]
    %v1337 = vld [vmem:[%s451 + $0x10] sm:$0xff]
    %v1338 = vld [vmem:[%s451 + $0x18] sm:$0xff]
    %v1339 = vld [vmem:[%s451 + $0x20] sm:$0xff]
    %v1340 = vld [vmem:[%s451 + $0x28] sm:$0xff]
    %v1341 = vld [vmem:[%s451 + $0x30] sm:$0xf]
    %v1342 = vld [vmem:[%s451 + $0x38] sm:$0xf]
    %v1343 = vrot.slane %v1006, 4
    %v1344 = vrot.slane %v1007, 4
    %v1345 = vsel %vm154, %v1343, %v1344
    %v1346 = vrot.slane %v1008, 4
    %v1347 = vsel %vm154, %v1344, %v1346
    %v1348 = vrot.slane %v1009, 4
    %v1349 = vsel %vm154, %v1346, %v1348
    %v1350 = vsel %vm147, %v1345, 0
    %v1352 = vsel %vm147, %v1347, 0
    %v1354 = vsel %vm147, %v1349, 0
    %v1357 = vsel %vm154, %v1341, 0
    %v1360 = vsel %vm154, %v1342, 0
    %1362 = vmatpush.msra.mxu0 0.0
    %1363 = vmatpush.msra.mxu0 0.0
    %1364 = vmatpush.msra.mxu0 0.0
    %1365 = vmatpush.msra.mxu0 0.0
    %1366 = vmatpush.msra.mxu0 0.0
    %1367 = vmatpush.msra.mxu0 0.0
    %1368 = vmatpush.msra.mxu0 0.0
    %1369 = vmatpush.msra.mxu0 0.0
    %1370 = vmatpush.msra.mxu0 0.0
    %1371 = vmatpush.msra.mxu0 0.0
    %1372 = vmatpush.msra.mxu0 0.0
    %1373 = vmatpush.msra.mxu0 0.0
    %1374 = vmatpush.msra.mxu0 %v1357
    %1375 = vmatpush.msra.mxu0 %v1339
    %1376 = vmatpush.msra.mxu0 %v1337
    %1377 = vmatpush.msra.mxu0 %v1335
    %1378 = vmatmul.f32.gmra.mxu0 %v1350
    %v1379 = vpop.f32.mrf.mxu0
    %v1380 = vadd.f32 0.0, %v1379
    %1381 = vmatmul.f32.gmra.mxu0 %v1352
    %v1382 = vpop.f32.mrf.mxu0
    %v1383 = vadd.f32 0.0, %v1382
    %1384 = vmatmul.f32.gmra.mxu0 %v1354
    %v1385 = vpop.f32.mrf.mxu0
    %v1386 = vadd.f32 0.0, %v1385
    %1387 = vdwg.mxu0
    %1388 = vmatpush.msra.mxu0 0.0
    %1389 = vmatpush.msra.mxu0 0.0
    %1390 = vmatpush.msra.mxu0 0.0
    %1391 = vmatpush.msra.mxu0 0.0
    %1392 = vmatpush.msra.mxu0 0.0
    %1393 = vmatpush.msra.mxu0 0.0
    %1394 = vmatpush.msra.mxu0 0.0
    %1395 = vmatpush.msra.mxu0 0.0
    %1396 = vmatpush.msra.mxu0 0.0
    %1397 = vmatpush.msra.mxu0 0.0
    %1398 = vmatpush.msra.mxu0 0.0
    %1399 = vmatpush.msra.mxu0 0.0
    %1400 = vmatpush.msra.mxu0 %v1360
    %1401 = vmatpush.msra.mxu0 %v1340
    %1402 = vmatpush.msra.mxu0 %v1338
    %1403 = vmatpush.msra.mxu0 %v1336
    %1404 = vmatmul.f32.gmra.mxu0 %v1350
    %v1405 = vpop.f32.mrf.mxu0
    %v1406 = vadd.f32 0.0, %v1405
    %1407 = vmatmul.f32.gmra.mxu0 %v1352
    %v1408 = vpop.f32.mrf.mxu0
    %v1409 = vadd.f32 0.0, %v1408
    %1410 = vmatmul.f32.gmra.mxu0 %v1354
    %v1411 = vpop.f32.mrf.mxu0
    %v1412 = vadd.f32 0.0, %v1411
    %1413 = vdwg.mxu0
    %v1414 = vadd.f32 %v1329, %v1380
    %v1415 = vadd.f32 %v1330, %v1406
    %v1416 = vadd.f32 %v1331, %v1383
    %v1417 = vadd.f32 %v1332, %v1409
    %v1418 = vadd.f32 %v1333, %v1386
    %v1419 = vadd.f32 %v1334, %v1412
    %v1420 = vld [vmem:[%s2] sm:$0x3]
    %v1422 = vperm.slane %v1420, 0
    %v1423 = vperm.slane %v1420, 1
    %v1426 = vadd.f32 %v1414, %v1422
    %v1427 = vadd.f32 %v1415, %v1423
    %v1428 = vadd.f32 %v1416, %v1422
    %v1429 = vadd.f32 %v1417, %v1423
    %v1430 = vadd.f32 %v1418, %v1422
    %v1431 = vadd.f32 %v1419, %v1423
    %v1432 = vmax.f32 %v1426, 0.0
    %v1433 = vmax.f32 %v1427, 0.0
    %v1434 = vmax.f32 %v1428, 0.0
    %v1435 = vmax.f32 %v1429, 0.0
    %v1436 = vmax.f32 %v1430, 0.0
    %v1437 = vmax.f32 %v1431, 0.0
    %1444 = vrot.lane.b32.xlu0 %v1432, 127
    %v1445 = vpop.permute.xlu0 %1444
    %1446 = vrot.lane.b32.xlu0 %v1433, 127
    %v1447 = vpop.permute.xlu0 %1446
    %1448 = vrot.lane.b32.xlu0 %v1434, 127
    %v1449 = vpop.permute.xlu0 %1448
    %1450 = vrot.lane.b32.xlu0 %v1435, 127
    %v1451 = vpop.permute.xlu0 %1450
    %1452 = vrot.lane.b32.xlu0 %v1436, 127
    %v1453 = vpop.permute.xlu0 %1452
    %1454 = vrot.lane.b32.xlu0 %v1437, 127
    %v1455 = vpop.permute.xlu0 %1454
    %v1456 = vsel %vm573, %v1445, %v1447
    %v1457 = vsel %vm573, %v1449, %v1451
    %v1458 = vsel %vm573, %v1453, %v1455
    %v1465 = vmax.f32 %v1432, %v1456
    %v1466 = vmax.f32 %v1433, %v1447
    %v1467 = vmax.f32 %v1434, %v1457
    %v1468 = vmax.f32 %v1435, %v1451
    %v1469 = vmax.f32 %v1436, %v1458
    %v1470 = vmax.f32 %v1437, %v1455
    %v1477 = vrot.slane %v1465, 1
    %v1478 = vrot.slane %v1467, 1
    %v1479 = vsel %vm139, %v1477, %v1478
    %v1480 = vrot.slane %v1466, 1
    %v1481 = vrot.slane %v1468, 1
    %v1482 = vsel %vm139, %v1480, %v1481
    %v1483 = vrot.slane %v1469, 1
    %v1484 = vsel %vm139, %v1478, %v1483
    %v1485 = vrot.slane %v1470, 1
    %v1486 = vsel %vm139, %v1481, %v1485
    %v1493 = vmax.f32 %v1465, %v1479
    %v1494 = vmax.f32 %v1466, %v1482
    %v1495 = vmax.f32 %v1467, %v1484
    %v1496 = vmax.f32 %v1468, %v1486
    %v1497 = vmax.f32 %v1469, %v1483
    %v1498 = vmax.f32 %v1470, %v1485
    %v1499 = vld [vmem:[%s3] sm:$0xff]
    %v1500 = vld [vmem:[%s3 + $0x8] sm:$0xf]
    %v1501 = vld [vmem:[#allocation3] sm:$0xff]
    %v1502 = vld [vmem:[#allocation3 + $0x8] sm:$0xff]
    %v1503 = vld [vmem:[#allocation3 + $0x10] sm:$0xff]
    %v1504 = vld [vmem:[#allocation3 + $0x18] sm:$0xff]
    %v1505 = vld [vmem:[#allocation3 + $0x20] sm:$0xff]
    %v1506 = vld [vmem:[#allocation3 + $0x28] sm:$0xff]
    %v1507 = vld [vmem:[#allocation3 + $0x30] sm:$0xff]
    %v1508 = vld [vmem:[#allocation3 + $0x38] sm:$0xff]
    %v1509 = vld [vmem:[#allocation3 + $0x40] sm:$0xff]
    %v1510 = vld [vmem:[#allocation3 + $0x48] sm:$0xff]
    %v1511 = vld [vmem:[#allocation3 + $0x50] sm:$0xff]
    %v1512 = vld [vmem:[#allocation3 + $0x58] sm:$0xff]
    %v1513 = vld [vmem:[#allocation3 + $0x60] sm:$0xff]
    %v1514 = vld [vmem:[#allocation3 + $0x68] sm:$0xff]
    %v1515 = vld [vmem:[#allocation3 + $0x70] sm:$0xff]
    %v1516 = vld [vmem:[#allocation3 + $0x78] sm:$0xff]
    %v1517 = vld [vmem:[#allocation3 + $0x80] sm:$0xff]
    %v1518 = vld [vmem:[#allocation3 + $0x88] sm:$0x7f]
    %v1520 = vsel %vm637, %v1494, 0
    %v1523 = vsel %vm637, %v1496, 0
    %v1526 = vsel %vm637, %v1498, 0
    %v1529 = vsel %vm139, %v1518, 0
    %1531 = vmatpush.msra.mxu0 %v1516
    %1532 = vmatpush.msra.mxu0 %v1515
    %1533 = vmatpush.msra.mxu0 %v1514
    %1534 = vmatpush.msra.mxu0 %v1513
    %1535 = vmatpush.msra.mxu0 %v1512
    %1536 = vmatpush.msra.mxu0 %v1511
    %1537 = vmatpush.msra.mxu0 %v1510
    %1538 = vmatpush.msra.mxu0 %v1509
    %1539 = vmatpush.msra.mxu0 %v1508
    %1540 = vmatpush.msra.mxu0 %v1507
    %1541 = vmatpush.msra.mxu0 %v1506
    %1542 = vmatpush.msra.mxu0 %v1505
    %1543 = vmatpush.msra.mxu0 %v1504
    %1544 = vmatpush.msra.mxu0 %v1503
    %1545 = vmatpush.msra.mxu0 %v1502
    %1546 = vmatpush.msra.mxu0 %v1501
    %1547 = vmatmul.f32.gmra.mxu0 %v1493
    %v1548 = vpop.f32.mrf.mxu0
    %v1549 = vadd.f32 0.0, %v1548
    %1550 = vmatmul.f32.gmra.mxu0 %v1495
    %v1551 = vpop.f32.mrf.mxu0
    %v1552 = vadd.f32 0.0, %v1551
    %1553 = vmatmul.f32.gmra.mxu0 %v1497
    %v1554 = vpop.f32.mrf.mxu0
    %v1555 = vadd.f32 0.0, %v1554
    %1556 = vdwg.mxu0
    %1557 = vmatpush.msra.mxu0 0.0
    %1558 = vmatpush.msra.mxu0 0.0
    %1559 = vmatpush.msra.mxu0 0.0
    %1560 = vmatpush.msra.mxu0 0.0
    %1561 = vmatpush.msra.mxu0 0.0
    %1562 = vmatpush.msra.mxu0 0.0
    %1563 = vmatpush.msra.mxu0 0.0
    %1564 = vmatpush.msra.mxu0 0.0
    %1565 = vmatpush.msra.mxu0 0.0
    %1566 = vmatpush.msra.mxu0 0.0
    %1567 = vmatpush.msra.mxu0 0.0
    %1568 = vmatpush.msra.mxu0 0.0
    %1569 = vmatpush.msra.mxu0 0.0
    %1570 = vmatpush.msra.mxu0 0.0
    %1571 = vmatpush.msra.mxu0 %v1529
    %1572 = vmatpush.msra.mxu0 %v1517
    %1573 = vmatmul.f32.gmra.mxu0 %v1520
    %v1574 = vpop.f32.mrf.mxu0
    %v1575 = vadd.f32 %v1549, %v1574
    %1576 = vmatmul.f32.gmra.mxu0 %v1523
    %v1577 = vpop.f32.mrf.mxu0
    %v1578 = vadd.f32 %v1552, %v1577
    %1579 = vmatmul.f32.gmra.mxu0 %v1526
    %v1580 = vpop.f32.mrf.mxu0
    %v1581 = vadd.f32 %v1555, %v1580
    %1582 = vdwg.mxu0
    %v1584 = vsel %vm702, %v1499, 0
    %v1587 = vsel %vm702, %v1500, 0
    %v1590 = vsel %vm139, %v1581, 0
    %1592 = vmatpush.msra.mxu0 0.0
    %1593 = vmatpush.msra.mxu0 0.0
    %1594 = vmatpush.msra.mxu0 0.0
    %1595 = vmatpush.msra.mxu0 0.0
    %1596 = vmatpush.msra.mxu0 0.0
    %1597 = vmatpush.msra.mxu0 0.0
    %1598 = vmatpush.msra.mxu0 0.0
    %1599 = vmatpush.msra.mxu0 0.0
    %1600 = vmatpush.msra.mxu0 0.0
    %1601 = vmatpush.msra.mxu0 0.0
    %1602 = vmatpush.msra.mxu0 0.0
    %1603 = vmatpush.msra.mxu0 0.0
    %1604 = vmatpush.msra.mxu0 0.0
    %1605 = vmatpush.msra.mxu0 %v1590
    %1606 = vmatpush.msra.mxu0 %v1578
    %1607 = vmatpush.msra.mxu0 %v1575
    %1608 = vmatmul.f32.gmra.mxu0 %v1584
    %v1609 = vpop.f32.mrf.mxu0
    %v1610 = vadd.f32 0.0, %v1609
    %1611 = vmatmul.f32.gmra.mxu0 %v1587
    %v1612 = vpop.f32.mrf.mxu0
    %v1613 = vadd.f32 0.0, %v1612
    %1614 = vdwg.mxu0
    %v1615 = vld [vmem:[#allocation6] sm:$0xff]
    %v1616 = vld [vmem:[#allocation6 + $0x8] sm:$0xff]
    %v1617 = vld [vmem:[#allocation6 + $0x10] sm:$0xff]
    %v1618 = vld [vmem:[#allocation6 + $0x18] sm:$0xff]
    %v1619 = vld [vmem:[#allocation6 + $0x20] sm:$0xff]
    %v1620 = vld [vmem:[#allocation6 + $0x28] sm:$0xff]
    %v1621 = vld [vmem:[#allocation6 + $0x30] sm:$0xff]
    %v1622 = vld [vmem:[#allocation6 + $0x38] sm:$0xff]
    %v1623 = vld [vmem:[#allocation6 + $0x40] sm:$0xff]
    %v1624 = vld [vmem:[%s744] sm:$0xff]
    %v1625 = vld [vmem:[%s744 + $0x8] sm:$0xff]
    %v1626 = vld [vmem:[%s744 + $0x10] sm:$0xff]
    %v1627 = vld [vmem:[%s744 + $0x18] sm:$0xff]
    %v1628 = vld [vmem:[%s744 + $0x20] sm:$0xff]
    %v1629 = vld [vmem:[%s744 + $0x28] sm:$0xff]
    %v1630 = vld [vmem:[%s744 + $0x30] sm:$0xff]
    %v1631 = vld [vmem:[%s744 + $0x38] sm:$0xff]
    %v1632 = vld [vmem:[%s744 + $0x40] sm:$0xff]
    %v1635 = vrot.slane %v1610, 1
    %v1636 = vrot.slane %v1613, 1
    %v1637 = vsel %vm139, %v1635, %v1636
    %v1638 = vsel %vm759, %v1637, 0
    %1640 = vmatpush.msra.mxu0 0.0
    %1641 = vmatpush.msra.mxu0 0.0
    %1642 = vmatpush.msra.mxu0 0.0
    %1643 = vmatpush.msra.mxu0 0.0
    %1644 = vmatpush.msra.mxu0 0.0
    %1645 = vmatpush.msra.mxu0 0.0
    %1646 = vmatpush.msra.mxu0 0.0
    %1647 = vmatpush.msra.mxu0 %v1632
    %1648 = vmatpush.msra.mxu0 %v1631
    %1649 = vmatpush.msra.mxu0 %v1630
    %1650 = vmatpush.msra.mxu0 %v1629
    %1651 = vmatpush.msra.mxu0 %v1628
    %1652 = vmatpush.msra.mxu0 %v1627
    %1653 = vmatpush.msra.mxu0 %v1626
    %1654 = vmatpush.msra.mxu0 %v1625
    %1655 = vmatpush.msra.mxu0 %v1624
    %1656 = vmatmul.f32.gmra.mxu0 %v1638
    %v1657 = vpop.f32.mrf.mxu0
    %v1658 = vadd.f32 0.0, %v1657
    %1659 = vdwg.mxu0
    %v1660 = vsel %vm759, %v1610, 0
    %1662 = vmatpush.msra.mxu0 0.0
    %1663 = vmatpush.msra.mxu0 0.0
    %1664 = vmatpush.msra.mxu0 0.0
    %1665 = vmatpush.msra.mxu0 0.0
    %1666 = vmatpush.msra.mxu0 0.0
    %1667 = vmatpush.msra.mxu0 0.0
    %1668 = vmatpush.msra.mxu0 0.0
    %1669 = vmatpush.msra.mxu0 %v1623
    %1670 = vmatpush.msra.mxu0 %v1622
    %1671 = vmatpush.msra.mxu0 %v1621
    %1672 = vmatpush.msra.mxu0 %v1620
    %1673 = vmatpush.msra.mxu0 %v1619
    %1674 = vmatpush.msra.mxu0 %v1618
    %1675 = vmatpush.msra.mxu0 %v1617
    %1676 = vmatpush.msra.mxu0 %v1616
    %1677 = vmatpush.msra.mxu0 %v1615
    %1678 = vmatmul.f32.gmra.mxu0 %v1660
    %v1679 = vpop.f32.mrf.mxu0
    %v1680 = vadd.f32 %v1658, %v1679
    %1681 = vdwg.mxu0
    %v1682 = vld [vmem:[%s804] sm:$0xff]
    %v1683 = vld [vmem:[%s804 + $0x8] sm:$0xff]
    %v1684 = vld [vmem:[%s804 + $0x10] sm:$0xff]
    %v1685 = vld [vmem:[%s804 + $0x18] sm:$0xff]
    %v1686 = vld [vmem:[%s804 + $0x20] sm:$0xff]
    %v1687 = vld [vmem:[%s804 + $0x28] sm:$0xff]
    %v1688 = vld [vmem:[%s804 + $0x30] sm:$0xff]
    %v1689 = vld [vmem:[%s804 + $0x38] sm:$0xff]
    %v1690 = vld [vmem:[%s804 + $0x40] sm:$0xff]
    %v1691 = vrot.slane %v1610, 2
    %v1692 = vrot.slane %v1613, 2
    %v1693 = vsel %vm286, %v1691, %v1692
    %v1694 = vsel %vm759, %v1693, 0
    %1696 = vmatpush.msra.mxu0 0.0
    %1697 = vmatpush.msra.mxu0 0.0
    %1698 = vmatpush.msra.mxu0 0.0
    %1699 = vmatpush.msra.mxu0 0.0
    %1700 = vmatpush.msra.mxu0 0.0
    %1701 = vmatpush.msra.mxu0 0.0
    %1702 = vmatpush.msra.mxu0 0.0
    %1703 = vmatpush.msra.mxu0 %v1690
    %1704 = vmatpush.msra.mxu0 %v1689
    %1705 = vmatpush.msra.mxu0 %v1688
    %1706 = vmatpush.msra.mxu0 %v1687
    %1707 = vmatpush.msra.mxu0 %v1686
    %1708 = vmatpush.msra.mxu0 %v1685
    %1709 = vmatpush.msra.mxu0 %v1684
    %1710 = vmatpush.msra.mxu0 %v1683
    %1711 = vmatpush.msra.mxu0 %v1682
    %1712 = vmatmul.f32.gmra.mxu0 %v1694
    %v1713 = vpop.f32.mrf.mxu0
    %v1714 = vadd.f32 0.0, %v1713
    %1715 = vdwg.mxu0
    %v1716 = vadd.f32 %v1680, %v1714
    %v1717 = vld [vmem:[%s840] sm:$0xff]
    %v1718 = vld [vmem:[%s840 + $0x8] sm:$0xff]
    %v1719 = vld [vmem:[%s840 + $0x10] sm:$0xff]
    %v1720 = vld [vmem:[%s840 + $0x18] sm:$0xff]
    %v1721 = vld [vmem:[%s840 + $0x20] sm:$0xff]
    %v1722 = vld [vmem:[%s840 + $0x28] sm:$0xff]
    %v1723 = vld [vmem:[%s840 + $0x30] sm:$0xff]
    %v1724 = vld [vmem:[%s840 + $0x38] sm:$0xff]
    %v1725 = vld [vmem:[%s840 + $0x40] sm:$0xff]
    %v1726 = vrot.slane %v1610, 3
    %v1727 = vrot.slane %v1613, 3
    %v1728 = vsel %vm373, %v1726, %v1727
    %v1729 = vsel %vm759, %v1728, 0
    %1731 = vmatpush.msra.mxu0 0.0
    %1732 = vmatpush.msra.mxu0 0.0
    %1733 = vmatpush.msra.mxu0 0.0
    %1734 = vmatpush.msra.mxu0 0.0
    %1735 = vmatpush.msra.mxu0 0.0
    %1736 = vmatpush.msra.mxu0 0.0
    %1737 = vmatpush.msra.mxu0 0.0
    %1738 = vmatpush.msra.mxu0 %v1725
    %1739 = vmatpush.msra.mxu0 %v1724
    %1740 = vmatpush.msra.mxu0 %v1723
    %1741 = vmatpush.msra.mxu0 %v1722
    %1742 = vmatpush.msra.mxu0 %v1721
    %1743 = vmatpush.msra.mxu0 %v1720
    %1744 = vmatpush.msra.mxu0 %v1719
    %1745 = vmatpush.msra.mxu0 %v1718
    %1746 = vmatpush.msra.mxu0 %v1717
    %1747 = vmatmul.f32.gmra.mxu0 %v1729
    %v1748 = vpop.f32.mrf.mxu0
    %v1749 = vadd.f32 0.0, %v1748
    %1750 = vdwg.mxu0
    %v1751 = vadd.f32 %v1716, %v1749
    %v1752 = vld [vmem:[%s876] sm:$0xff]
    %v1753 = vld [vmem:[%s876 + $0x8] sm:$0xff]
    %v1754 = vld [vmem:[%s876 + $0x10] sm:$0xff]
    %v1755 = vld [vmem:[%s876 + $0x18] sm:$0xff]
    %v1756 = vld [vmem:[%s876 + $0x20] sm:$0xff]
    %v1757 = vld [vmem:[%s876 + $0x28] sm:$0xff]
    %v1758 = vld [vmem:[%s876 + $0x30] sm:$0xff]
    %v1759 = vld [vmem:[%s876 + $0x38] sm:$0xff]
    %v1760 = vld [vmem:[%s876 + $0x40] sm:$0xff]
    %v1761 = vrot.slane %v1610, 4
    %v1762 = vrot.slane %v1613, 4
    %v1763 = vsel %vm154, %v1761, %v1762
    %v1764 = vsel %vm759, %v1763, 0
    %1766 = vmatpush.msra.mxu0 0.0
    %1767 = vmatpush.msra.mxu0 0.0
    %1768 = vmatpush.msra.mxu0 0.0
    %1769 = vmatpush.msra.mxu0 0.0
    %1770 = vmatpush.msra.mxu0 0.0
    %1771 = vmatpush.msra.mxu0 0.0
    %1772 = vmatpush.msra.mxu0 0.0
    %1773 = vmatpush.msra.mxu0 %v1760
    %1774 = vmatpush.msra.mxu0 %v1759
    %1775 = vmatpush.msra.mxu0 %v1758
    %1776 = vmatpush.msra.mxu0 %v1757
    %1777 = vmatpush.msra.mxu0 %v1756
    %1778 = vmatpush.msra.mxu0 %v1755
    %1779 = vmatpush.msra.mxu0 %v1754
    %1780 = vmatpush.msra.mxu0 %v1753
    %1781 = vmatpush.msra.mxu0 %v1752
    %1782 = vmatmul.f32.gmra.mxu0 %v1764
    %v1783 = vpop.f32.mrf.mxu0
    %v1784 = vadd.f32 0.0, %v1783
    %1785 = vdwg.mxu0
    %v1786 = vadd.f32 %v1751, %v1784
    %v1787 = vld [vmem:[%s6] sm:$0x1]
    %v1789 = vperm.slane %v1787, 0
    %v1791 = vadd.f32 %v1786, %v1789
    %v1792 = vmax.f32 %v1791, 0.0
    %1794 = vrot.lane.b32.xlu0 %v1792, 127
    %v1795 = vpop.permute.xlu0 %1794
    %v1797 = vmax.f32 %v1792, %v1795
    %v1799 = vrot.slane %v1797, 1
    %v1801 = vmax.f32 %v1797, %v1799
    %v1802 = vld [vmem:[%s7] sm:$0xf]
    %v1803 = vld [vmem:[%s8] sm:$0xff]
    %v1804 = vld [vmem:[%s8 + $0x8] sm:$0xff]
    %v1805 = vld [vmem:[%s8 + $0x10] sm:$0xff]
    %v1806 = vld [vmem:[%s8 + $0x18] sm:$0xff]
    %v1807 = vld [vmem:[%s8 + $0x20] sm:$0xff]
    %v1808 = vld [vmem:[%s8 + $0x28] sm:$0xff]
    %v1809 = vld [vmem:[%s8 + $0x30] sm:$0xff]
    %v1810 = vld [vmem:[%s8 + $0x38] sm:$0xff]
    %v1811 = vld [vmem:[%s8 + $0x40] sm:$0xff]
    %v1812 = vld [vmem:[%s8 + $0x48] sm:$0xff]
    %v1813 = vld [vmem:[%s8 + $0x50] sm:$0xff]
    %v1814 = vld [vmem:[%s8 + $0x58] sm:$0xff]
    %v1815 = vld [vmem:[%s8 + $0x60] sm:$0xff]
    %v1816 = vld [vmem:[%s8 + $0x68] sm:$0xff]
    %v1817 = vld [vmem:[%s8 + $0x70] sm:$0xff]
    %v1818 = vld [vmem:[%s8 + $0x78] sm:$0x7f]
    %v1820 = vsel %vm573, %v1801, 0
    %v1823 = vsel %vm139, %v1818, 0
    %1825 = vmatpush.msra.mxu0 %v1823
    %1826 = vmatpush.msra.mxu0 %v1817
    %1827 = vmatpush.msra.mxu0 %v1816
    %1828 = vmatpush.msra.mxu0 %v1815
    %1829 = vmatpush.msra.mxu0 %v1814
    %1830 = vmatpush.msra.mxu0 %v1813
    %1831 = vmatpush.msra.mxu0 %v1812
    %1832 = vmatpush.msra.mxu0 %v1811
    %1833 = vmatpush.msra.mxu0 %v1810
    %1834 = vmatpush.msra.mxu0 %v1809
    %1835 = vmatpush.msra.mxu0 %v1808
    %1836 = vmatpush.msra.mxu0 %v1807
    %1837 = vmatpush.msra.mxu0 %v1806
    %1838 = vmatpush.msra.mxu0 %v1805
    %1839 = vmatpush.msra.mxu0 %v1804
    %1840 = vmatpush.msra.mxu0 %v1803
    %1841 = vmatmul.f32.gmra.mxu0 %v1820
    %v1842 = vpop.f32.mrf.mxu0
    %v1843 = vadd.f32 0.0, %v1842
    %1844 = vdwg.mxu0
    %v1846 = vsel %vm970, %v1802, 0
    %v1849 = vsel %vm139, %v1843, 0
    %1851 = vmatpush.msra.mxu0 0.0
    %1852 = vmatpush.msra.mxu0 0.0
    %1853 = vmatpush.msra.mxu0 0.0
    %1854 = vmatpush.msra.mxu0 0.0
    %1855 = vmatpush.msra.mxu0 0.0
    %1856 = vmatpush.msra.mxu0 0.0
    %1857 = vmatpush.msra.mxu0 0.0
    %1858 = vmatpush.msra.mxu0 0.0
    %1859 = vmatpush.msra.mxu0 0.0
    %1860 = vmatpush.msra.mxu0 0.0
    %1861 = vmatpush.msra.mxu0 0.0
    %1862 = vmatpush.msra.mxu0 0.0
    %1863 = vmatpush.msra.mxu0 0.0
    %1864 = vmatpush.msra.mxu0 0.0
    %1865 = vmatpush.msra.mxu0 0.0
    %1866 = vmatpush.msra.mxu0 %v1849
    %1867 = vmatmul.f32.gmra.mxu0 %v1846
    %v1868 = vpop.f32.mrf.mxu0
    %v1869 = vadd.f32 0.0, %v1868
    %1870 = vdwg.mxu0
    %1871 = vst.msk [vmem:[#allocation2 + $0x1] sm:$0x1] %vm997, %v1869
    %1872 = vst.msk [vmem:[#allocation2 + $0x2] sm:$0x2] %vm999, %v1869
    %1873 = vst.msk [vmem:[#allocation2 + $0x3] sm:$0x4] %vm1001, %v1869
    %1874 = vst.msk [vmem:[#allocation2 + $0x4] sm:$0x8] %vm1003, %v1869
    %v1875 = vld [vmem:[#allocation2] sm:$0x3]
    %v1876 = vld [vmem:[#allocation8] sm:$0xff]
    %v1877 = vld [vmem:[#allocation8 + $0x8] sm:$0xff]
    %v1878 = vld [vmem:[#allocation8 + $0x10] sm:$0xff]
    %v1879 = vld [vmem:[#allocation8 + $0x18] sm:$0xff]
    %v1880 = vld [vmem:[#allocation8 + $0x20] sm:$0xff]
    %v1881 = vld [vmem:[#allocation8 + $0x28] sm:$0xff]
    %v1882 = vld [vmem:[#allocation8 + $0x30] sm:$0xff]
    %v1883 = vld [vmem:[#allocation8 + $0x38] sm:$0xff]
    %v1884 = vld [vmem:[#allocation2 + $0x2] sm:$0x3]
    %s1885 = scalar_lea.vmem [#allocation8], 64
    %v1886 = vld [vmem:[%s1885] sm:$0xff]
    %v1887 = vld [vmem:[%s1885 + $0x8] sm:$0xff]
    %v1888 = vld [vmem:[%s1885 + $0x10] sm:$0xff]
    %v1889 = vld [vmem:[%s1885 + $0x18] sm:$0xff]
    %v1890 = vld [vmem:[%s1885 + $0x20] sm:$0xff]
    %v1891 = vld [vmem:[%s1885 + $0x28] sm:$0xff]
    %v1892 = vld [vmem:[%s1885 + $0x30] sm:$0xff]
    %v1893 = vld [vmem:[%s1885 + $0x38] sm:$0xff]
    %vm1894 = vcmask 523264
    %v1896 = vsel %vm1894, %v1884, 0
    %1898 = vmatpush.msra.mxu0 0.0
    %1899 = vmatpush.msra.mxu0 0.0
    %1900 = vmatpush.msra.mxu0 0.0
    %1901 = vmatpush.msra.mxu0 0.0
    %1902 = vmatpush.msra.mxu0 0.0
    %1903 = vmatpush.msra.mxu0 0.0
    %1904 = vmatpush.msra.mxu0 0.0
    %1905 = vmatpush.msra.mxu0 0.0
    %1906 = vmatpush.msra.mxu0 %v1893
    %1907 = vmatpush.msra.mxu0 %v1892
    %1908 = vmatpush.msra.mxu0 %v1891
    %1909 = vmatpush.msra.mxu0 %v1890
    %1910 = vmatpush.msra.mxu0 %v1889
    %1911 = vmatpush.msra.mxu0 %v1888
    %1912 = vmatpush.msra.mxu0 %v1887
    %1913 = vmatpush.msra.mxu0 %v1886
    %1914 = vmatmul.f32.gmra.mxu0 %v1896
    %v1915 = vpop.f32.mrf.mxu0
    %v1916 = vadd.f32 0.0, %v1915
    %1917 = vdwg.mxu0
    %v1919 = vsel %vm1894, %v1875, 0
    %1921 = vmatpush.msra.mxu0 0.0
    %1922 = vmatpush.msra.mxu0 0.0
    %1923 = vmatpush.msra.mxu0 0.0
    %1924 = vmatpush.msra.mxu0 0.0
    %1925 = vmatpush.msra.mxu0 0.0
    %1926 = vmatpush.msra.mxu0 0.0
    %1927 = vmatpush.msra.mxu0 0.0
    %1928 = vmatpush.msra.mxu0 0.0
    %1929 = vmatpush.msra.mxu0 %v1883
    %1930 = vmatpush.msra.mxu0 %v1882
    %1931 = vmatpush.msra.mxu0 %v1881
    %1932 = vmatpush.msra.mxu0 %v1880
    %1933 = vmatpush.msra.mxu0 %v1879
    %1934 = vmatpush.msra.mxu0 %v1878
    %1935 = vmatpush.msra.mxu0 %v1877
    %1936 = vmatpush.msra.mxu0 %v1876
    %1937 = vmatmul.f32.gmra.mxu0 %v1919
    %v1938 = vpop.f32.mrf.mxu0
    %v1939 = vadd.f32 %v1916, %v1938
    %1940 = vdwg.mxu0
    %v1941 = vld [vmem:[#allocation2 + $0x4] sm:$0x3]
    %s1942 = scalar_lea.vmem [#allocation8], 128
    %v1943 = vld [vmem:[%s1942] sm:$0xff]
    %v1944 = vld [vmem:[%s1942 + $0x8] sm:$0xff]
    %v1945 = vld [vmem:[%s1942 + $0x10] sm:$0xff]
    %v1946 = vld [vmem:[%s1942 + $0x18] sm:$0xff]
    %v1947 = vld [vmem:[%s1942 + $0x20] sm:$0xff]
    %v1948 = vld [vmem:[%s1942 + $0x28] sm:$0xff]
    %v1949 = vld [vmem:[%s1942 + $0x30] sm:$0xff]
    %v1950 = vld [vmem:[%s1942 + $0x38] sm:$0xff]
    %v1952 = vsel %vm1894, %v1941, 0
    %1954 = vmatpush.msra.mxu0 0.0
    %1955 = vmatpush.msra.mxu0 0.0
    %1956 = vmatpush.msra.mxu0 0.0
    %1957 = vmatpush.msra.mxu0 0.0
    %1958 = vmatpush.msra.mxu0 0.0
    %1959 = vmatpush.msra.mxu0 0.0
    %1960 = vmatpush.msra.mxu0 0.0
    %1961 = vmatpush.msra.mxu0 0.0
    %1962 = vmatpush.msra.mxu0 %v1950
    %1963 = vmatpush.msra.mxu0 %v1949
    %1964 = vmatpush.msra.mxu0 %v1948
    %1965 = vmatpush.msra.mxu0 %v1947
    %1966 = vmatpush.msra.mxu0 %v1946
    %1967 = vmatpush.msra.mxu0 %v1945
    %1968 = vmatpush.msra.mxu0 %v1944
    %1969 = vmatpush.msra.mxu0 %v1943
    %1970 = vmatmul.f32.gmra.mxu0 %v1952
    %v1971 = vpop.f32.mrf.mxu0
    %v1972 = vadd.f32 0.0, %v1971
    %1973 = vdwg.mxu0
    %v1974 = vadd.f32 %v1939, %v1972
    %v1975 = vld [vmem:[#allocation2 + $0x6] sm:$0x3]
    %s1976 = scalar_lea.vmem [#allocation8], 192
    %v1977 = vld [vmem:[%s1976] sm:$0xff]
    %v1978 = vld [vmem:[%s1976 + $0x8] sm:$0xff]
    %v1979 = vld [vmem:[%s1976 + $0x10] sm:$0xff]
    %v1980 = vld [vmem:[%s1976 + $0x18] sm:$0xff]
    %v1981 = vld [vmem:[%s1976 + $0x20] sm:$0xff]
    %v1982 = vld [vmem:[%s1976 + $0x28] sm:$0xff]
    %v1983 = vld [vmem:[%s1976 + $0x30] sm:$0xff]
    %v1984 = vld [vmem:[%s1976 + $0x38] sm:$0xff]
    %v1986 = vsel %vm1894, %v1975, 0
    %1988 = vmatpush.msra.mxu0 0.0
    %1989 = vmatpush.msra.mxu0 0.0
    %1990 = vmatpush.msra.mxu0 0.0
    %1991 = vmatpush.msra.mxu0 0.0
    %1992 = vmatpush.msra.mxu0 0.0
    %1993 = vmatpush.msra.mxu0 0.0
    %1994 = vmatpush.msra.mxu0 0.0
    %1995 = vmatpush.msra.mxu0 0.0
    %1996 = vmatpush.msra.mxu0 %v1984
    %1997 = vmatpush.msra.mxu0 %v1983
    %1998 = vmatpush.msra.mxu0 %v1982
    %1999 = vmatpush.msra.mxu0 %v1981
    %2000 = vmatpush.msra.mxu0 %v1980
    %2001 = vmatpush.msra.mxu0 %v1979
    %2002 = vmatpush.msra.mxu0 %v1978
    %2003 = vmatpush.msra.mxu0 %v1977
    %2004 = vmatmul.f32.gmra.mxu0 %v1986
    %v2005 = vpop.f32.mrf.mxu0
    %v2006 = vadd.f32 0.0, %v2005
    %2007 = vdwg.mxu0
    %v2008 = vadd.f32 %v1974, %v2006
    %v2009 = vld [vmem:[%s10] sm:$0x1]
    %v2011 = vperm.slane %v2009, 0
    %v2013 = vadd.f32 %v2008, %v2011
    %v2014 = vmax.f32 %v2013, 0.0
    %v2015 = vld [vmem:[%s11] sm:$0xff]
    %v2016 = vld [vmem:[%s11 + $0x8] sm:$0xff]
    %v2017 = vld [vmem:[%s11 + $0x10] sm:$0xff]
    %v2018 = vld [vmem:[%s11 + $0x18] sm:$0xff]
    %v2019 = vld [vmem:[%s11 + $0x20] sm:$0xff]
    %v2020 = vld [vmem:[%s11 + $0x28] sm:$0xff]
    %v2021 = vld [vmem:[%s11 + $0x30] sm:$0xff]
    %v2022 = vld [vmem:[%s11 + $0x38] sm:$0xff]
    %v2023 = vld [vmem:[%s11 + $0x40] sm:$0xff]
    %v2024 = vld [vmem:[%s11 + $0x48] sm:$0xff]
    %v2025 = vld [vmem:[%s11 + $0x50] sm:$0xff]
    %v2026 = vld [vmem:[%s11 + $0x58] sm:$0xff]
    %v2027 = vld [vmem:[%s11 + $0x60] sm:$0xff]
    %v2028 = vld [vmem:[%s11 + $0x68] sm:$0xff]
    %v2029 = vld [vmem:[%s11 + $0x70] sm:$0xff]
    %v2030 = vld [vmem:[%s12] sm:$0x1]
    %v2032 = vperm.slane %v2030, 0
    %vm2034 = vcmask 982016
    %v2036 = vsel %vm2034, %v2014, 0
    %2038 = vmatpush.msra.mxu0 0.0
    %2039 = vmatpush.msra.mxu0 %v2029
    %2040 = vmatpush.msra.mxu0 %v2028
    %2041 = vmatpush.msra.mxu0 %v2027
    %2042 = vmatpush.msra.mxu0 %v2026
    %2043 = vmatpush.msra.mxu0 %v2025
    %2044 = vmatpush.msra.mxu0 %v2024
    %2045 = vmatpush.msra.mxu0 %v2023
    %2046 = vmatpush.msra.mxu0 %v2022
    %2047 = vmatpush.msra.mxu0 %v2021
    %2048 = vmatpush.msra.mxu0 %v2020
    %2049 = vmatpush.msra.mxu0 %v2019
    %2050 = vmatpush.msra.mxu0 %v2018
    %2051 = vmatpush.msra.mxu0 %v2017
    %2052 = vmatpush.msra.mxu0 %v2016
    %2053 = vmatpush.msra.mxu0 %v2015
    %2054 = vmatmul.f32.gmra.mxu0 %v2036
    %v2055 = vpop.f32.mrf.mxu0
    %v2056 = vadd.f32 %v2032, %v2055
    %2057 = vdwg.mxu0
    %v2058 = vmax.f32 %v2056, 0.0
    %v2059 = vld [vmem:[#allocation9] sm:$0xff]
    %v2060 = vld [vmem:[#allocation9 + $0x8] sm:$0xff]
    %v2061 = vld [vmem:[#allocation9 + $0x10] sm:$0xff]
    %v2062 = vld [vmem:[#allocation9 + $0x18] sm:$0xff]
    %v2063 = vld [vmem:[#allocation9 + $0x20] sm:$0xff]
    %v2064 = vld [vmem:[#allocation9 + $0x28] sm:$0xff]
    %v2065 = vld [vmem:[#allocation9 + $0x30] sm:$0xff]
    %v2066 = vld [vmem:[#allocation9 + $0x38] sm:$0xff]
    %v2067 = vld [vmem:[#allocation9 + $0x40] sm:$0xff]
    %v2068 = vld [vmem:[#allocation9 + $0x48] sm:$0xff]
    %v2069 = vld [vmem:[#allocation9 + $0x50] sm:$0xf]
    %v2070 = vld [vmem:[%s14] sm:$0x1]
    %v2072 = vperm.slane %v2070, 0
    %vm2074 = vcmask 687104
    %v2076 = vsel %vm2074, %v2058, 0
    %v2079 = vsel %vm154, %v2069, 0
    %2081 = vmatpush.msra.mxu0 0.0
    %2082 = vmatpush.msra.mxu0 0.0
    %2083 = vmatpush.msra.mxu0 0.0
    %2084 = vmatpush.msra.mxu0 0.0
    %2085 = vmatpush.msra.mxu0 0.0
    %2086 = vmatpush.msra.mxu0 %v2079
    %2087 = vmatpush.msra.mxu0 %v2068
    %2088 = vmatpush.msra.mxu0 %v2067
    %2089 = vmatpush.msra.mxu0 %v2066
    %2090 = vmatpush.msra.mxu0 %v2065
    %2091 = vmatpush.msra.mxu0 %v2064
    %2092 = vmatpush.msra.mxu0 %v2063
    %2093 = vmatpush.msra.mxu0 %v2062
    %2094 = vmatpush.msra.mxu0 %v2061
    %2095 = vmatpush.msra.mxu0 %v2060
    %2096 = vmatpush.msra.mxu0 %v2059
    %2097 = vmatmul.f32.gmra.mxu0 %v2076
    %v2098 = vpop.f32.mrf.mxu0
    %v2099 = vadd.f32 %v2072, %v2098
    %2100 = vdwg.mxu0
    %2101 = vst [vmem:[#allocation11] sm:$0x3] %v2099
    // Predicated region
    $region78: #{lenet_forward.1} parent=1 // pred_check
      _
    $region79: #{lenet_forward.1} parent=1 // pred_check_branch
      %2103 = sbr.rel (0) target = $region81
    $region80: #{lenet_forward.1} parent=1 // pred_region
      %2105 = vsyncadd [#allocation5], 0
      %s2107 = sshll.u32 [#allocation11], 4
      %s2108 = int_to_ptr.vmem [resolvable:$true] %s2107
      %s2109 = sshll.u32 %s15, 4
      %s2110 = int_to_ptr.hbm [resolvable:$true] %s2109
      %2112 = dma.vmem_to_hbm [thread:$0]  %s2108, 32, %s2110, [#allocation5]
    $region81: #{lenet_forward.1} parent=1 // pred_fallthru
      _
    // Predicated region
    $region82: #{lenet_forward.1} parent=1 // pred_check
      _
    $region83: #{lenet_forward.1} parent=1 // pred_check_branch
      %2114 = sbr.rel (0) target = $region85
    $region84: #{lenet_forward.1} parent=1 // pred_region
      %2116 = dma.done [#allocation5], 32
    $region85: #{lenet_forward.1} parent=1 // pred_fallthru
      _
    %2117 = vsyncpa [#allocation4], 1
    %2118 = vsyncpa [#allocation7], 1
    %2119 = vsyncpa [#allocation10], 1
    %2120 = vsyncpa [#allocation5], 1

</llo_original>
